<compile_context>
chip_gen: v7x
topology: tpu7x:2x2x1
jax: 0.10.0
libtpu: 0.0.40
codegen_flags: <defaults>
</compile_context>

<pallas_src>
import functools

import jax
import jax.numpy as jnp
from jax.experimental import pallas as pl
from jax.experimental.pallas import tpu as pltpu


def neigh_agg_kernel(item_ref, time_ref, rat_ref, u_ref,
                     wr1a_ref, wr1b_ref, br1_ref,
                     wr2_ref, br2_ref,
                     wa1o_ref, wa1u_ref, ba1_ref,
                     wa2_ref, ba2_ref,
                     wa3_ref, ba3_ref,
                     out_ref, *, neighbors):
    f32 = jnp.float32
    tb, d = u_ref.shape          # TB users, embed dim D
    n = neighbors                # neighbors per user

    # Gathered neighbor embeddings for TB users, flattened to (TB*N, D).
    it = item_ref[...].astype(f32)
    tm = time_ref[...].astype(f32)
    rt = rat_ref[...].astype(f32)

    # h = relu(w_r1(cat(item+time, rat)))  -- concat folded into two dots.
    h1 = jnp.dot(it + tm, wr1a_ref[...], preferred_element_type=f32)
    h1 = h1 + jnp.dot(rt, wr1b_ref[...], preferred_element_type=f32) + br1_ref[...]
    h1 = jnp.maximum(h1, 0.0)                                  # (TB*N, D)

    # o = relu(w_r2(h))
    o = jnp.dot(h1, wr2_ref[...], preferred_element_type=f32) + br2_ref[...]
    o = jnp.maximum(o, 0.0)                                    # (TB*N, D)

    # att1(cat(o, u_rep)) = o @ wa1_o + (u @ wa1_u + ba1) broadcast per user.
    u = u_ref[...].astype(f32)                                 # (TB, D)
    u_term = jnp.dot(u, wa1u_ref[...], preferred_element_type=f32) + ba1_ref[...]
    u_rep = jnp.broadcast_to(u_term[:, None, :], (tb, n, d)).reshape(tb * n, d)

    a1 = jnp.maximum(jnp.dot(o, wa1o_ref[...], preferred_element_type=f32) + u_rep, 0.0)
    a2 = jnp.maximum(jnp.dot(a1, wa2_ref[...], preferred_element_type=f32) + ba2_ref[...], 0.0)

    # att3: D -> 1 as a VPU multiply + lane reduction (no 1-wide MXU matmul).
    a2_3 = a2.reshape(tb, n, d)
    o_3 = o.reshape(tb, n, d)
    logits = jnp.sum(a2_3 * wa3_ref[...], axis=-1) + ba3_ref[...]   # (TB, N)

    # Per-user softmax over the neighbor axis.
    m = jnp.max(logits, axis=-1, keepdims=True)
    e = jnp.exp(logits - m)
    denom = jnp.sum(e, axis=-1, keepdims=True)
    att = e * pl.reciprocal(denom, approx=True)                     # (TB, N)

    # Weighted aggregation over neighbors: (TB, D).
    out = jnp.sum(o_3 * att[:, :, None], axis=1)
    out_ref[...] = out.astype(out_ref.dtype)


def neigh_agg(user, user_to_item, user_to_time, user_to_rat, params,
              *, block_users=None):
    """user: (B,) int32; user_to_*: (B, N) int32. Returns (B, D) float32."""
    (u2e, i2e, r2e, t2e,
     w_r1, b_r1, w_r2, b_r2,
     att1_w, att1_b, att2_w, att2_b, att3_w, att3_b) = params

    B, N = user_to_item.shape
    D = u2e.shape[1]

    # --- choose users-per-step (multiple of 8 so all blocks are tile-legal) ---
    if block_users is None:
        block_users = max(8, (256 // max(N, 1)) // 8 * 8)
    TB = max(8, -(-int(block_users) // 8) * 8)
    B_pad = pl.cdiv(B, TB) * TB
    pad = B_pad - B
    if pad:
        user = jnp.pad(user, (0, pad))
        user_to_item = jnp.pad(user_to_item, ((0, pad), (0, 0)))
        user_to_time = jnp.pad(user_to_time, ((0, pad), (0, 0)))
        user_to_rat = jnp.pad(user_to_rat, ((0, pad), (0, 0)))

    # --- glue: embedding gathers in bf16 (halves HBM traffic), flat (B*N, D) ---
    bf16 = jnp.bfloat16
    item_emb = jnp.take(i2e.astype(bf16), user_to_item.reshape(-1), axis=0)
    time_emb = jnp.take(t2e.astype(bf16), user_to_time.reshape(-1), axis=0)
    rat_emb = jnp.take(r2e.astype(bf16), user_to_rat.reshape(-1), axis=0)
    u_emb = jnp.take(u2e, user, axis=0).astype(jnp.float32)          # (B_pad, D)

    # --- split weights so the kernel needs no lane-axis concatenation ---
    wr1_top, wr1_bot = w_r1[:D], w_r1[D:]          # (D, D) each
    wa1_o, wa1_u = att1_w[:D], att1_w[D:]          # (D, D) each
    wa3_row = att3_w.reshape(1, D)                 # (D, 1) -> (1, D)

    const = lambda shape: pl.BlockSpec(shape, lambda b: (0,) * len(shape))

    grid_spec = pltpu.PrefetchScalarGridSpec(
        num_scalar_prefetch=0,
        grid=(B_pad // TB,),
        in_specs=[
            pl.BlockSpec((TB * N, D), lambda b: (b, 0)),   # item emb
            pl.BlockSpec((TB * N, D), lambda b: (b, 0)),   # time emb
            pl.BlockSpec((TB * N, D), lambda b: (b, 0)),   # rating emb
            pl.BlockSpec((TB, D), lambda b: (b, 0)),       # user emb
            const((D, D)), const((D, D)), const((1, D)),   # w_r1 (split) + b
            const((D, D)), const((1, D)),                  # w_r2 + b
            const((D, D)), const((D, D)), const((1, D)),   # att1 (split) + b
            const((D, D)), const((1, D)),                  # att2 + b
            const((1, D)), const((1, 1)),                  # att3 row + b
        ],
        out_specs=pl.BlockSpec((TB, D), lambda b: (b, 0)),
    )

    out = pl.pallas_call(
        functools.partial(neigh_agg_kernel, neighbors=N),
        out_shape=jax.ShapeDtypeStruct((B_pad, D), jnp.float32),
        grid_spec=grid_spec,
        compiler_params=pltpu.CompilerParams(
            dimension_semantics=("parallel",)),
    )(item_emb, time_emb, rat_emb, u_emb,
      wr1_top, wr1_bot, b_r1,
      w_r2, b_r2,
      wa1_o, wa1_u, att1_b,
      att2_w, att2_b,
      wa3_row, att3_b)

    return out[:B]


def neigh_agg_reference(user, user_to_item, user_to_time, user_to_rat, params):
    """Pure-JAX reference (same bf16-rounded embeddings as the kernel path)."""
    (u2e, i2e, r2e, t2e,
     w_r1, b_r1, w_r2, b_r2,
     att1_w, att1_b, att2_w, att2_b, att3_w, att3_b) = params
    bf16 = jnp.bfloat16
    item_e = jnp.take(i2e.astype(bf16), user_to_item, axis=0).astype(jnp.float32)
    time_e = jnp.take(t2e.astype(bf16), user_to_time, axis=0).astype(jnp.float32)
    rat_e = jnp.take(r2e.astype(bf16), user_to_rat, axis=0).astype(jnp.float32)
    u_e = jnp.take(u2e, user, axis=0)                                # (B, D)

    x = jnp.concatenate([item_e + time_e, rat_e], axis=-1)           # (B, N, 2D)
    h = jax.nn.relu(x @ w_r1 + b_r1)
    o = jax.nn.relu(h @ w_r2 + b_r2)
    u_rep = jnp.broadcast_to(u_e[:, None, :], o.shape)
    a_in = jnp.concatenate([o, u_rep], axis=-1)
    a1 = jax.nn.relu(a_in @ att1_w + att1_b)
    a2 = jax.nn.relu(a1 @ att2_w + att2_b)
    logits = a2 @ att3_w + att3_b                                    # (B, N, 1)
    att = jax.nn.softmax(logits, axis=1)
    return jnp.sum(att * o, axis=1)                                  # (B, D)


def init_params(key, num_users, num_items, num_ratings, num_times, embed_dim):
    """Deterministic synthetic params (shapes as implied by neighAgg.__init__)."""
    ks = jax.random.split(key, 14)
    d = embed_dim

    def linear(kw, kb, fan_in, fan_out):
        bound = 1.0 / jnp.sqrt(fan_in)
        w = jax.random.uniform(kw, (fan_in, fan_out), jnp.float32, -bound, bound)
        b = jax.random.uniform(kb, (1, fan_out), jnp.float32, -bound, bound)
        return w, b

    u2e = jax.random.normal(ks[0], (num_users, d), jnp.float32)
    i2e = jax.random.normal(ks[1], (num_items, d), jnp.float32)
    r2e = jax.random.normal(ks[2], (num_ratings, d), jnp.float32)
    t2e = jax.random.normal(ks[3], (num_times, d), jnp.float32)

    w_r1, b_r1 = linear(ks[4], ks[5], 2 * d, d)
    w_r2, b_r2 = linear(ks[6], ks[7], d, d)
    att1_w, att1_b = linear(ks[8], ks[9], 2 * d, d)
    att2_w, att2_b = linear(ks[10], ks[11], d, d)
    att3_w, att3_b = linear(ks[12], ks[13], d, 1)

    return (u2e, i2e, r2e, t2e,
            w_r1, b_r1, w_r2, b_r2,
            att1_w, att1_b, att2_w, att2_b, att3_w, att3_b)


if __name__ == "__main__":
    key = jax.random.PRNGKey(0)
    B, N, D = 16, 8, 32
    num_users, num_items, num_ratings, num_times = 40, 100, 5, 24

    kp, k1, k2, k3, k4 = jax.random.split(key, 5)
    params = init_params(kp, num_users, num_items, num_ratings, num_times, D)

    user = jax.random.randint(k1, (B,), 0, num_users, dtype=jnp.int32)
    user_to_item = jax.random.randint(k2, (B, N), 0, num_items, dtype=jnp.int32)
    user_to_time = jax.random.randint(k3, (B, N), 0, num_times, dtype=jnp.int32)
    user_to_rat = jax.random.randint(k4, (B, N), 0, num_ratings, dtype=jnp.int32)

    # block_users=8 -> grid of 2 steps (exercises multi-step pipelining /
    # megacore sharding); auto-sizing picks larger TB for realistic batches.
    out = neigh_agg(user, user_to_item, user_to_time, user_to_rat, params,
                    block_users=8)
    out = jax.block_until_ready(out)
    assert out.shape == (B, D) and out.dtype == jnp.float32

    ref = jax.block_until_ready(
        neigh_agg_reference(user, user_to_item, user_to_time, user_to_rat, params))
    assert jnp.allclose(out, ref, rtol=1e-2, atol=1e-2), (
        float(jnp.max(jnp.abs(out - ref))))

    print("KERNEL_OK")
</pallas_src>

<mosaic_0001>
module attributes {stable_mosaic.version = 11 : i64} {
  func.func @neigh_agg_kernel(%arg0: i32, %arg1: memref<64x32xbf16, #tpu.memory_space<vmem>>, %arg2: memref<64x32xbf16, #tpu.memory_space<vmem>>, %arg3: memref<64x32xbf16, #tpu.memory_space<vmem>>, %arg4: memref<8x32xf32, #tpu.memory_space<vmem>>, %arg5: memref<32x32xf32, #tpu.memory_space<vmem>>, %arg6: memref<32x32xf32, #tpu.memory_space<vmem>>, %arg7: memref<1x32xf32, #tpu.memory_space<vmem>>, %arg8: memref<32x32xf32, #tpu.memory_space<vmem>>, %arg9: memref<1x32xf32, #tpu.memory_space<vmem>>, %arg10: memref<32x32xf32, #tpu.memory_space<vmem>>, %arg11: memref<32x32xf32, #tpu.memory_space<vmem>>, %arg12: memref<1x32xf32, #tpu.memory_space<vmem>>, %arg13: memref<32x32xf32, #tpu.memory_space<vmem>>, %arg14: memref<1x32xf32, #tpu.memory_space<vmem>>, %arg15: memref<1x32xf32, #tpu.memory_space<vmem>>, %arg16: memref<1x1xf32, #tpu.memory_space<vmem>>, %arg17: memref<8x32xf32, #tpu.memory_space<vmem>>) attributes {dimension_semantics = [#tpu.dimension_semantics<parallel>], iteration_bounds = array<i64: 2>, scalar_prefetch = 0 : i64, scratch_operands = 0 : i64, tpu.core_type = #tpu.core_type<tc>, window_params = [{transform_indices = @transform_0, window_bounds = array<i64: 64, 32>}, {transform_indices = @transform_1, window_bounds = array<i64: 64, 32>}, {transform_indices = @transform_2, window_bounds = array<i64: 64, 32>}, {transform_indices = @transform_3, window_bounds = array<i64: 8, 32>}, {pipeline_mode = #tpu.pipeline_mode<synchronous>, transform_indices = @transform_4, window_bounds = array<i64: 32, 32>}, {pipeline_mode = #tpu.pipeline_mode<synchronous>, transform_indices = @transform_5, window_bounds = array<i64: 32, 32>}, {pipeline_mode = #tpu.pipeline_mode<synchronous>, transform_indices = @transform_6, window_bounds = array<i64: 1, 32>}, {pipeline_mode = #tpu.pipeline_mode<synchronous>, transform_indices = @transform_7, window_bounds = array<i64: 32, 32>}, {pipeline_mode = #tpu.pipeline_mode<synchronous>, transform_indices = @transform_8, window_bounds = array<i64: 1, 32>}, {pipeline_mode = #tpu.pipeline_mode<synchronous>, transform_indices = @transform_9, window_bounds = array<i64: 32, 32>}, {pipeline_mode = #tpu.pipeline_mode<synchronous>, transform_indices = @transform_10, window_bounds = array<i64: 32, 32>}, {pipeline_mode = #tpu.pipeline_mode<synchronous>, transform_indices = @transform_11, window_bounds = array<i64: 1, 32>}, {pipeline_mode = #tpu.pipeline_mode<synchronous>, transform_indices = @transform_12, window_bounds = array<i64: 32, 32>}, {pipeline_mode = #tpu.pipeline_mode<synchronous>, transform_indices = @transform_13, window_bounds = array<i64: 1, 32>}, {pipeline_mode = #tpu.pipeline_mode<synchronous>, transform_indices = @transform_14, window_bounds = array<i64: 1, 32>}, {pipeline_mode = #tpu.pipeline_mode<synchronous>, transform_indices = @transform_15, window_bounds = array<i64: 1, 1>}, {transform_indices = @transform_16, window_bounds = array<i64: 8, 32>}]} {
    %c0 = arith.constant 0 : index
    %c0_0 = arith.constant 0 : index
    %0 = vector.load %arg1[%c0, %c0_0] : memref<64x32xbf16, #tpu.memory_space<vmem>>, vector<64x32xbf16>
    %1 = arith.extf %0 : vector<64x32xbf16> to vector<64x32xf32>
    %c0_1 = arith.constant 0 : index
    %c0_2 = arith.constant 0 : index
    %2 = vector.load %arg2[%c0_1, %c0_2] : memref<64x32xbf16, #tpu.memory_space<vmem>>, vector<64x32xbf16>
    %3 = arith.extf %2 : vector<64x32xbf16> to vector<64x32xf32>
    %c0_3 = arith.constant 0 : index
    %c0_4 = arith.constant 0 : index
    %4 = vector.load %arg3[%c0_3, %c0_4] : memref<64x32xbf16, #tpu.memory_space<vmem>>, vector<64x32xbf16>
    %5 = arith.extf %4 : vector<64x32xbf16> to vector<64x32xf32>
    %6 = arith.addf %1, %3 : vector<64x32xf32>
    %c0_5 = arith.constant 0 : index
    %c0_6 = arith.constant 0 : index
    %7 = vector.load %arg5[%c0_5, %c0_6] : memref<32x32xf32, #tpu.memory_space<vmem>>, vector<32x32xf32>
    %cst = arith.constant dense<0.000000e+00> : vector<64x32xf32>
    %8 = tpu.matmul %6, %7, %cst {dimension_numbers = #tpu.dot_dimension_numbers<[1], [0], [0], [1], [0, 0, 1, 1], [], []>} : vector<64x32xf32>, vector<32x32xf32>, vector<64x32xf32> -> vector<64x32xf32>
    %c0_7 = arith.constant 0 : index
    %c0_8 = arith.constant 0 : index
    %9 = vector.load %arg6[%c0_7, %c0_8] : memref<32x32xf32, #tpu.memory_space<vmem>>, vector<32x32xf32>
    %cst_9 = arith.constant dense<0.000000e+00> : vector<64x32xf32>
    %10 = tpu.matmul %5, %9, %cst_9 {dimension_numbers = #tpu.dot_dimension_numbers<[1], [0], [0], [1], [0, 0, 1, 1], [], []>} : vector<64x32xf32>, vector<32x32xf32>, vector<64x32xf32> -> vector<64x32xf32>
    %11 = arith.addf %8, %10 : vector<64x32xf32>
    %c0_10 = arith.constant 0 : index
    %c0_11 = arith.constant 0 : index
    %12 = vector.load %arg7[%c0_10, %c0_11] : memref<1x32xf32, #tpu.memory_space<vmem>>, vector<1x32xf32>
    %13 = vector.broadcast %12 : vector<1x32xf32> to vector<64x32xf32>
    %14 = arith.addf %11, %13 : vector<64x32xf32>
    %cst_12 = arith.constant 0.000000e+00 : f32
    %15 = vector.broadcast %cst_12 : f32 to vector<64x32xf32>
    %16 = arith.maximumf %14, %15 : vector<64x32xf32>
    %c0_13 = arith.constant 0 : index
    %c0_14 = arith.constant 0 : index
    %17 = vector.load %arg8[%c0_13, %c0_14] : memref<32x32xf32, #tpu.memory_space<vmem>>, vector<32x32xf32>
    %cst_15 = arith.constant dense<0.000000e+00> : vector<64x32xf32>
    %18 = tpu.matmul %16, %17, %cst_15 {dimension_numbers = #tpu.dot_dimension_numbers<[1], [0], [0], [1], [0, 0, 1, 1], [], []>} : vector<64x32xf32>, vector<32x32xf32>, vector<64x32xf32> -> vector<64x32xf32>
    %c0_16 = arith.constant 0 : index
    %c0_17 = arith.constant 0 : index
    %19 = vector.load %arg9[%c0_16, %c0_17] : memref<1x32xf32, #tpu.memory_space<vmem>>, vector<1x32xf32>
    %20 = vector.broadcast %19 : vector<1x32xf32> to vector<64x32xf32>
    %21 = arith.addf %18, %20 : vector<64x32xf32>
    %cst_18 = arith.constant 0.000000e+00 : f32
    %22 = vector.broadcast %cst_18 : f32 to vector<64x32xf32>
    %23 = arith.maximumf %21, %22 : vector<64x32xf32>
    %c0_19 = arith.constant 0 : index
    %c0_20 = arith.constant 0 : index
    %24 = vector.load %arg4[%c0_19, %c0_20] : memref<8x32xf32, #tpu.memory_space<vmem>>, vector<8x32xf32>
    %c0_21 = arith.constant 0 : index
    %c0_22 = arith.constant 0 : index
    %25 = vector.load %arg11[%c0_21, %c0_22] : memref<32x32xf32, #tpu.memory_space<vmem>>, vector<32x32xf32>
    %cst_23 = arith.constant dense<0.000000e+00> : vector<8x32xf32>
    %26 = tpu.matmul %24, %25, %cst_23 {dimension_numbers = #tpu.dot_dimension_numbers<[1], [0], [0], [1], [0, 0, 1, 1], [], []>} : vector<8x32xf32>, vector<32x32xf32>, vector<8x32xf32> -> vector<8x32xf32>
    %c0_24 = arith.constant 0 : index
    %c0_25 = arith.constant 0 : index
    %27 = vector.load %arg12[%c0_24, %c0_25] : memref<1x32xf32, #tpu.memory_space<vmem>>, vector<1x32xf32>
    %28 = vector.broadcast %27 : vector<1x32xf32> to vector<8x32xf32>
    %29 = arith.addf %26, %28 : vector<8x32xf32>
    %30 = vector.shape_cast %29 : vector<8x32xf32> to vector<8x1x32xf32>
    %31 = vector.shape_cast %30 : vector<8x1x32xf32> to vector<8x1x32xf32>
    %32 = vector.broadcast %31 : vector<8x1x32xf32> to vector<8x8x32xf32>
    %33 = vector.shape_cast %32 : vector<8x8x32xf32> to vector<64x32xf32>
    %c0_26 = arith.constant 0 : index
    %c0_27 = arith.constant 0 : index
    %34 = vector.load %arg10[%c0_26, %c0_27] : memref<32x32xf32, #tpu.memory_space<vmem>>, vector<32x32xf32>
    %cst_28 = arith.constant dense<0.000000e+00> : vector<64x32xf32>
    %35 = tpu.matmul %23, %34, %cst_28 {dimension_numbers = #tpu.dot_dimension_numbers<[1], [0], [0], [1], [0, 0, 1, 1], [], []>} : vector<64x32xf32>, vector<32x32xf32>, vector<64x32xf32> -> vector<64x32xf32>
    %36 = arith.addf %35, %33 : vector<64x32xf32>
    %cst_29 = arith.constant 0.000000e+00 : f32
    %37 = vector.broadcast %cst_29 : f32 to vector<64x32xf32>
    %38 = arith.maximumf %36, %37 : vector<64x32xf32>
    %c0_30 = arith.constant 0 : index
    %c0_31 = arith.constant 0 : index
    %39 = vector.load %arg13[%c0_30, %c0_31] : memref<32x32xf32, #tpu.memory_space<vmem>>, vector<32x32xf32>
    %cst_32 = arith.constant dense<0.000000e+00> : vector<64x32xf32>
    %40 = tpu.matmul %38, %39, %cst_32 {dimension_numbers = #tpu.dot_dimension_numbers<[1], [0], [0], [1], [0, 0, 1, 1], [], []>} : vector<64x32xf32>, vector<32x32xf32>, vector<64x32xf32> -> vector<64x32xf32>
    %c0_33 = arith.constant 0 : index
    %c0_34 = arith.constant 0 : index
    %41 = vector.load %arg14[%c0_33, %c0_34] : memref<1x32xf32, #tpu.memory_space<vmem>>, vector<1x32xf32>
    %42 = vector.broadcast %41 : vector<1x32xf32> to vector<64x32xf32>
    %43 = arith.addf %40, %42 : vector<64x32xf32>
    %cst_35 = arith.constant 0.000000e+00 : f32
    %44 = vector.broadcast %cst_35 : f32 to vector<64x32xf32>
    %45 = arith.maximumf %43, %44 : vector<64x32xf32>
    %46 = vector.shape_cast %45 : vector<64x32xf32> to vector<8x8x32xf32>
    %47 = vector.shape_cast %23 : vector<64x32xf32> to vector<8x8x32xf32>
    %c0_36 = arith.constant 0 : index
    %c0_37 = arith.constant 0 : index
    %48 = vector.load %arg15[%c0_36, %c0_37] : memref<1x32xf32, #tpu.memory_space<vmem>>, vector<1x32xf32>
    %49 = vector.shape_cast %48 : vector<1x32xf32> to vector<1x1x32xf32>
    %50 = vector.broadcast %49 : vector<1x1x32xf32> to vector<8x8x32xf32>
    %51 = arith.mulf %46, %50 : vector<8x8x32xf32>
    %cst_38 = arith.constant dense<0.000000e+00> : vector<8x8xf32>
    %52 = vector.multi_reduction <add>, %51, %cst_38 [2] : vector<8x8x32xf32> to vector<8x8xf32>
    %c0_39 = arith.constant 0 : index
    %c0_40 = arith.constant 0 : index
    %53 = vector.load %arg16[%c0_39, %c0_40] : memref<1x1xf32, #tpu.memory_space<vmem>>, vector<1x1xf32>
    %54 = vector.broadcast %53 : vector<1x1xf32> to vector<8x8xf32>
    %55 = arith.addf %52, %54 : vector<8x8xf32>
    %cst_41 = arith.constant dense<0xFF800000> : vector<8xf32>
    %56 = vector.multi_reduction <maximumf>, %55, %cst_41 [1] : vector<8x8xf32> to vector<8xf32>
    %57 = vector.shape_cast %56 : vector<8xf32> to vector<8x1xf32>
    %58 = vector.broadcast %57 : vector<8x1xf32> to vector<8x8xf32>
    %59 = arith.subf %55, %58 : vector<8x8xf32>
    %60 = math.exp %59 : vector<8x8xf32>
    %cst_42 = arith.constant dense<0.000000e+00> : vector<8xf32>
    %61 = vector.multi_reduction <add>, %60, %cst_42 [1] : vector<8x8xf32> to vector<8xf32>
    %62 = vector.shape_cast %61 : vector<8xf32> to vector<8x1xf32>
    %63 = tpu.reciprocal %62 {approx = true} : vector<8x1xf32> -> vector<8x1xf32>
    %64 = vector.broadcast %63 : vector<8x1xf32> to vector<8x8xf32>
    %65 = arith.mulf %60, %64 : vector<8x8xf32>
    %66 = vector.shape_cast %65 : vector<8x8xf32> to vector<8x8x1xf32>
    %67 = vector.broadcast %66 : vector<8x8x1xf32> to vector<8x8x32xf32>
    %68 = arith.mulf %47, %67 : vector<8x8x32xf32>
    %cst_43 = arith.constant dense<0.000000e+00> : vector<8x32xf32>
    %69 = vector.multi_reduction <add>, %68, %cst_43 [1] : vector<8x8x32xf32> to vector<8x32xf32>
    %c0_44 = arith.constant 0 : index
    %c0_45 = arith.constant 0 : index
    %70 = vector.load %arg17[%c0_44, %c0_45] : memref<8x32xf32, #tpu.memory_space<vmem>>, vector<8x32xf32>
    tpu.vector_store %arg17[%c0_44, %c0_45], %69 {strides = array<i32>} : memref<8x32xf32, #tpu.memory_space<vmem>>, vector<8x32xf32>,
    return
  }
  func.func @transform_0(%arg0: i32) -> (i32, i32) {
    %c0_i32 = arith.constant 0 : i32
    %c0_i32_0 = arith.constant 0 : i32
    return %arg0, %c0_i32 : i32, i32
  }
  func.func @transform_1(%arg0: i32) -> (i32, i32) {
    %c0_i32 = arith.constant 0 : i32
    %c0_i32_0 = arith.constant 0 : i32
    return %arg0, %c0_i32 : i32, i32
  }
  func.func @transform_2(%arg0: i32) -> (i32, i32) {
    %c0_i32 = arith.constant 0 : i32
    %c0_i32_0 = arith.constant 0 : i32
    return %arg0, %c0_i32 : i32, i32
  }
  func.func @transform_3(%arg0: i32) -> (i32, i32) {
    %c0_i32 = arith.constant 0 : i32
    %c0_i32_0 = arith.constant 0 : i32
    return %arg0, %c0_i32 : i32, i32
  }
  func.func @transform_4(%arg0: i32) -> (i32, i32) {
    %c0_i32 = arith.constant 0 : i32
    %c0_i32_0 = arith.constant 0 : i32
    %c0_i32_1 = arith.constant 0 : i32
    return %c0_i32, %c0_i32_0 : i32, i32
  }
  func.func @transform_5(%arg0: i32) -> (i32, i32) {
    %c0_i32 = arith.constant 0 : i32
    %c0_i32_0 = arith.constant 0 : i32
    %c0_i32_1 = arith.constant 0 : i32
    return %c0_i32, %c0_i32_0 : i32, i32
  }
  func.func @transform_6(%arg0: i32) -> (i32, i32) {
    %c0_i32 = arith.constant 0 : i32
    %c0_i32_0 = arith.constant 0 : i32
    %c0_i32_1 = arith.constant 0 : i32
    return %c0_i32, %c0_i32_0 : i32, i32
  }
  func.func @transform_7(%arg0: i32) -> (i32, i32) {
    %c0_i32 = arith.constant 0 : i32
    %c0_i32_0 = arith.constant 0 : i32
    %c0_i32_1 = arith.constant 0 : i32
    return %c0_i32, %c0_i32_0 : i32, i32
  }
  func.func @transform_8(%arg0: i32) -> (i32, i32) {
    %c0_i32 = arith.constant 0 : i32
    %c0_i32_0 = arith.constant 0 : i32
    %c0_i32_1 = arith.constant 0 : i32
    return %c0_i32, %c0_i32_0 : i32, i32
  }
  func.func @transform_9(%arg0: i32) -> (i32, i32) {
    %c0_i32 = arith.constant 0 : i32
    %c0_i32_0 = arith.constant 0 : i32
    %c0_i32_1 = arith.constant 0 : i32
    return %c0_i32, %c0_i32_0 : i32, i32
  }
  func.func @transform_10(%arg0: i32) -> (i32, i32) {
    %c0_i32 = arith.constant 0 : i32
    %c0_i32_0 = arith.constant 0 : i32
    %c0_i32_1 = arith.constant 0 : i32
    return %c0_i32, %c0_i32_0 : i32, i32
  }
  func.func @transform_11(%arg0: i32) -> (i32, i32) {
    %c0_i32 = arith.constant 0 : i32
    %c0_i32_0 = arith.constant 0 : i32
    %c0_i32_1 = arith.constant 0 : i32
    return %c0_i32, %c0_i32_0 : i32, i32
  }
  func.func @transform_12(%arg0: i32) -> (i32, i32) {
    %c0_i32 = arith.constant 0 : i32
    %c0_i32_0 = arith.constant 0 : i32
    %c0_i32_1 = arith.constant 0 : i32
    return %c0_i32, %c0_i32_0 : i32, i32
  }
  func.func @transform_13(%arg0: i32) -> (i32, i32) {
    %c0_i32 = arith.constant 0 : i32
    %c0_i32_0 = arith.constant 0 : i32
    %c0_i32_1 = arith.constant 0 : i32
    return %c0_i32, %c0_i32_0 : i32, i32
  }
  func.func @transform_14(%arg0: i32) -> (i32, i32) {
    %c0_i32 = arith.constant 0 : i32
    %c0_i32_0 = arith.constant 0 : i32
    %c0_i32_1 = arith.constant 0 : i32
    return %c0_i32, %c0_i32_0 : i32, i32
  }
  func.func @transform_15(%arg0: i32) -> (i32, i32) {
    %c0_i32 = arith.constant 0 : i32
    %c0_i32_0 = arith.constant 0 : i32
    %c0_i32_1 = arith.constant 0 : i32
    return %c0_i32, %c0_i32_0 : i32, i32
  }
  func.func @transform_16(%arg0: i32) -> (i32, i32) {
    %c0_i32 = arith.constant 0 : i32
    %c0_i32_0 = arith.constant 0 : i32
    return %arg0, %c0_i32 : i32, i32
  }
}

</mosaic_0001>

<llo_original>
// kernel: tpu_custom_call.1
$region0: #{tpu_custom_call.1}
  #allocation0 [shape = 'u32[]', space=smem, size = 0x4, offset = 0x4, fixed_abs, tag = 'smem constant byte address 0x4 - core index']
  #allocation1 [shape = 'u32[144,128]{1,0:T(1,128)}', space=vmem, size = 0x12000, scoped, tag = 'internal scratch']
  #allocation2 [shape = 'f32[1,1]{1,0:T(1,128)S(1)}', space=vmem, size = 0x200, scoped, tag = 'scoped memory for tpu_custom_call.1']
  %s0 = inlined_call_operand.vmem [shape: bf16[128,32], index: 0, kind: input, shape index: {}]
  %s1 = inlined_call_operand.vmem [shape: bf16[128,32], index: 1, kind: input, shape index: {}]
  %s2 = inlined_call_operand.vmem [shape: bf16[128,32], index: 2, kind: input, shape index: {}]
  %s3 = inlined_call_operand.vmem [shape: f32[16,32], index: 3, kind: input, shape index: {}]
  %s4 = inlined_call_operand.vmem [shape: f32[32,32], index: 4, kind: input, shape index: {}]
  %s5 = inlined_call_operand.vmem [shape: f32[32,32], index: 5, kind: input, shape index: {}]
  %s6 = inlined_call_operand.vmem [shape: f32[1,32], index: 6, kind: input, shape index: {}]
  %s7 = inlined_call_operand.vmem [shape: f32[32,32], index: 7, kind: input, shape index: {}]
  %s8 = inlined_call_operand.vmem [shape: f32[1,32], index: 8, kind: input, shape index: {}]
  %s9 = inlined_call_operand.vmem [shape: f32[32,32], index: 9, kind: input, shape index: {}]
  %s10 = inlined_call_operand.vmem [shape: f32[32,32], index: 10, kind: input, shape index: {}]
  %s11 = inlined_call_operand.vmem [shape: f32[1,32], index: 11, kind: input, shape index: {}]
  %s12 = inlined_call_operand.vmem [shape: f32[32,32], index: 12, kind: input, shape index: {}]
  %s13 = inlined_call_operand.vmem [shape: f32[1,32], index: 13, kind: input, shape index: {}]
  %s14 = inlined_call_operand.vmem [shape: f32[1,32], index: 14, kind: input, shape index: {}]
  %s15 = inlined_call_operand.<no memory space> [shape: f32[1,1], index: 15, kind: input, shape index: {}]
  %s16 = inlined_call_operand.hbm [shape: f32[16,32], index: 16, kind: output, shape index: {}]
  %s17 = sld [smem:[#allocation0]]
  $region97: #{tpu_custom_call.1} parent=0
    _
  %s19 = ssub.s32 1, %s17
  %s20 = scalar_select 0, %s19, %s17
  %v21 = vstv %s15
  %22 = vst [vmem:[#allocation2] sm:$0x1] %v21
  $region1: #{tpu_custom_call.1} parent=0
    #allocation3 [shape = 'u8[8192]{0}', space=vmem, size = 0x2000, scoped, tag = 'output window, operand 0']
    #allocation4 [shape = 's32[2]{0}', space=sflag, size = 0x8, scoped, tag = 'scoped memory for tpu_custom_call.1']
    %23 = vsyncpa [#allocation4], 0
    %s24 = scalar_lea.sflag [#allocation4], 1
    %25 = vsyncpa %s24, 0
    loop: start=0, step=1, limit=4
    $region2: #{tpu_custom_call.1} parent=1 // loop_pre_header
      _
    $region3: #{tpu_custom_call.1} parent=1 // loop_header
      %s27 = sphi 0, %s31
      %p28 = scmp.ge.s32.totalorder %s27, 4
      %s37 = sphi 0, %s39
      %s40 = sphi 0, %s37
      %s41 = sphi 0, %s40
      %s57 = sphi 0, %s41
      %s63 = sphi 0, %s65
      %s66 = sphi 0, %s63
      %s67 = sphi 0, %s66
      %s83 = sphi 0, %s67
      %s89 = sphi 0, %s91
      %s92 = sphi 0, %s89
      %s93 = sphi 0, %s92
      %s109 = sphi 0, %s93
      %s115 = sphi 0, %s117
      %s118 = sphi 0, %s115
      %s119 = sphi 0, %s118
      %s135 = sphi 0, %s119
      %s139 = sphi 0, %s139
      %s141 = sphi 0, %s139
      %s142 = sphi 0, %s141
      %s156 = sphi 0, %s142
      %s160 = sphi 0, %s160
      %s162 = sphi 0, %s160
      %s163 = sphi 0, %s162
      %s177 = sphi 0, %s163
      %s181 = sphi 0, %s181
      %s183 = sphi 0, %s181
      %s184 = sphi 0, %s183
      %s198 = sphi 0, %s184
      %s202 = sphi 0, %s202
      %s204 = sphi 0, %s202
      %s205 = sphi 0, %s204
      %s219 = sphi 0, %s205
      %s223 = sphi 0, %s223
      %s225 = sphi 0, %s223
      %s226 = sphi 0, %s225
      %s240 = sphi 0, %s226
      %s244 = sphi 0, %s244
      %s246 = sphi 0, %s244
      %s247 = sphi 0, %s246
      %s261 = sphi 0, %s247
      %s265 = sphi 0, %s265
      %s267 = sphi 0, %s265
      %s268 = sphi 0, %s267
      %s282 = sphi 0, %s268
      %s286 = sphi 0, %s286
      %s288 = sphi 0, %s286
      %s289 = sphi 0, %s288
      %s303 = sphi 0, %s289
      %s307 = sphi 0, %s307
      %s309 = sphi 0, %s307
      %s310 = sphi 0, %s309
      %s324 = sphi 0, %s310
      %s328 = sphi 0, %s328
      %s330 = sphi 0, %s328
      %s331 = sphi 0, %s330
      %s345 = sphi 0, %s331
      %s349 = sphi 0, %s349
      %s351 = sphi 0, %s349
      %s352 = sphi 0, %s351
      %s366 = sphi 0, %s352
      %s370 = sphi 0, %s370
      %s372 = sphi 0, %s370
      %s373 = sphi 0, %s372
      %s387 = sphi 0, %s373
      %s393 = sphi 0, %s395
      %s396 = sphi 0, %s393
      %s397 = sphi 0, %s396
      %s413 = sphi 0, %s397
    $region4: #{tpu_custom_call.1} parent=1 // loop_header_branch
      %30 = sbr.rel (%p28) target = $region8
    $region5: #{tpu_custom_call.1} parent=1 // loop_body
      %s32 = ssub.s32 %s27, 1
      %s33 = ssub.s32 %s27, 2
      %s34 = sadd.s32 %s27, 1
      %s35 = ssub.s32 %s27, %s34
      %p36 = scmp.eq.s32.totalorder %s35, 0
      %s38 = sadd.s32 %s37, 1
      %s39 = scalar_select %p36, %s37, %s38
      %p42 = pneg %p36
      %p43 = scmp.eq.s32.totalorder %s27, 1
      %p44 = por %p42, %p43
      %p45 = scmp.ne.s32.totalorder %s37, %s40
      %p46 = scmp.eq.s32.totalorder %s27, 0
      %p47 = por %p45, %p46
      %p48 = scmp.ne.s32.totalorder %s37, %s40
      %p49 = scmp.eq.s32.totalorder %s32, 1
      %p50 = por %p48, %p49
      %p51 = scmp.ne.s32.totalorder %s40, %s41
      %p52 = scmp.eq.s32.totalorder %s32, 0
      %p53 = por %p51, %p52
      %p54 = scmp.ne.s32.totalorder %s40, %s41
      %p55 = scmp.eq.s32.totalorder %s33, 1
      %p56 = por %p54, %p55
      %p58 = scmp.ne.s32.totalorder %s41, %s57
      %p59 = scmp.eq.s32.totalorder %s33, 0
      %p60 = por %p58, %p59
      %s61 = ssub.s32 %s27, %s34
      %p62 = scmp.eq.s32.totalorder %s61, 0
      %s64 = sadd.s32 %s63, 1
      %s65 = scalar_select %p62, %s63, %s64
      %p68 = pneg %p62
      %p69 = scmp.eq.s32.totalorder %s27, 1
      %p70 = por %p68, %p69
      %p71 = scmp.ne.s32.totalorder %s63, %s66
      %p72 = scmp.eq.s32.totalorder %s27, 0
      %p73 = por %p71, %p72
      %p74 = scmp.ne.s32.totalorder %s63, %s66
      %p75 = scmp.eq.s32.totalorder %s32, 1
      %p76 = por %p74, %p75
      %p77 = scmp.ne.s32.totalorder %s66, %s67
      %p78 = scmp.eq.s32.totalorder %s32, 0
      %p79 = por %p77, %p78
      %p80 = scmp.ne.s32.totalorder %s66, %s67
      %p81 = scmp.eq.s32.totalorder %s33, 1
      %p82 = por %p80, %p81
      %p84 = scmp.ne.s32.totalorder %s67, %s83
      %p85 = scmp.eq.s32.totalorder %s33, 0
      %p86 = por %p84, %p85
      %s87 = ssub.s32 %s27, %s34
      %p88 = scmp.eq.s32.totalorder %s87, 0
      %s90 = sadd.s32 %s89, 1
      %s91 = scalar_select %p88, %s89, %s90
      %p94 = pneg %p88
      %p95 = scmp.eq.s32.totalorder %s27, 1
      %p96 = por %p94, %p95
      %p97 = scmp.ne.s32.totalorder %s89, %s92
      %p98 = scmp.eq.s32.totalorder %s27, 0
      %p99 = por %p97, %p98
      %p100 = scmp.ne.s32.totalorder %s89, %s92
      %p101 = scmp.eq.s32.totalorder %s32, 1
      %p102 = por %p100, %p101
      %p103 = scmp.ne.s32.totalorder %s92, %s93
      %p104 = scmp.eq.s32.totalorder %s32, 0
      %p105 = por %p103, %p104
      %p106 = scmp.ne.s32.totalorder %s92, %s93
      %p107 = scmp.eq.s32.totalorder %s33, 1
      %p108 = por %p106, %p107
      %p110 = scmp.ne.s32.totalorder %s93, %s109
      %p111 = scmp.eq.s32.totalorder %s33, 0
      %p112 = por %p110, %p111
      %s113 = ssub.s32 %s27, %s34
      %p114 = scmp.eq.s32.totalorder %s113, 0
      %s116 = sadd.s32 %s115, 1
      %s117 = scalar_select %p114, %s115, %s116
      %p120 = pneg %p114
      %p121 = scmp.eq.s32.totalorder %s27, 1
      %p122 = por %p120, %p121
      %p123 = scmp.ne.s32.totalorder %s115, %s118
      %p124 = scmp.eq.s32.totalorder %s27, 0
      %p125 = por %p123, %p124
      %p126 = scmp.ne.s32.totalorder %s115, %s118
      %p127 = scmp.eq.s32.totalorder %s32, 1
      %p128 = por %p126, %p127
      %p129 = scmp.ne.s32.totalorder %s118, %s119
      %p130 = scmp.eq.s32.totalorder %s32, 0
      %p131 = por %p129, %p130
      %p132 = scmp.ne.s32.totalorder %s118, %s119
      %p133 = scmp.eq.s32.totalorder %s33, 1
      %p134 = por %p132, %p133
      %p136 = scmp.ne.s32.totalorder %s119, %s135
      %p137 = scmp.eq.s32.totalorder %s33, 0
      %p138 = por %p136, %p137
      %s140 = sadd.s32 %s139, 1
      %p143 = scmp.eq.s32.totalorder %s27, 1
      %p144 = scmp.ne.s32.totalorder %s139, %s141
      %p145 = scmp.eq.s32.totalorder %s27, 0
      %p146 = por %p144, %p145
      %p147 = scmp.ne.s32.totalorder %s139, %s141
      %p148 = scmp.eq.s32.totalorder %s32, 1
      %p149 = por %p147, %p148
      %p150 = scmp.ne.s32.totalorder %s141, %s142
      %p151 = scmp.eq.s32.totalorder %s32, 0
      %p152 = por %p150, %p151
      %p153 = scmp.ne.s32.totalorder %s141, %s142
      %p154 = scmp.eq.s32.totalorder %s33, 1
      %p155 = por %p153, %p154
      %p157 = scmp.ne.s32.totalorder %s142, %s156
      %p158 = scmp.eq.s32.totalorder %s33, 0
      %p159 = por %p157, %p158
      %s161 = sadd.s32 %s160, 1
      %p164 = scmp.eq.s32.totalorder %s27, 1
      %p165 = scmp.ne.s32.totalorder %s160, %s162
      %p166 = scmp.eq.s32.totalorder %s27, 0
      %p167 = por %p165, %p166
      %p168 = scmp.ne.s32.totalorder %s160, %s162
      %p169 = scmp.eq.s32.totalorder %s32, 1
      %p170 = por %p168, %p169
      %p171 = scmp.ne.s32.totalorder %s162, %s163
      %p172 = scmp.eq.s32.totalorder %s32, 0
      %p173 = por %p171, %p172
      %p174 = scmp.ne.s32.totalorder %s162, %s163
      %p175 = scmp.eq.s32.totalorder %s33, 1
      %p176 = por %p174, %p175
      %p178 = scmp.ne.s32.totalorder %s163, %s177
      %p179 = scmp.eq.s32.totalorder %s33, 0
      %p180 = por %p178, %p179
      %s182 = sadd.s32 %s181, 1
      %p185 = scmp.eq.s32.totalorder %s27, 1
      %p186 = scmp.ne.s32.totalorder %s181, %s183
      %p187 = scmp.eq.s32.totalorder %s27, 0
      %p188 = por %p186, %p187
      %p189 = scmp.ne.s32.totalorder %s181, %s183
      %p190 = scmp.eq.s32.totalorder %s32, 1
      %p191 = por %p189, %p190
      %p192 = scmp.ne.s32.totalorder %s183, %s184
      %p193 = scmp.eq.s32.totalorder %s32, 0
      %p194 = por %p192, %p193
      %p195 = scmp.ne.s32.totalorder %s183, %s184
      %p196 = scmp.eq.s32.totalorder %s33, 1
      %p197 = por %p195, %p196
      %p199 = scmp.ne.s32.totalorder %s184, %s198
      %p200 = scmp.eq.s32.totalorder %s33, 0
      %p201 = por %p199, %p200
      %s203 = sadd.s32 %s202, 1
      %p206 = scmp.eq.s32.totalorder %s27, 1
      %p207 = scmp.ne.s32.totalorder %s202, %s204
      %p208 = scmp.eq.s32.totalorder %s27, 0
      %p209 = por %p207, %p208
      %p210 = scmp.ne.s32.totalorder %s202, %s204
      %p211 = scmp.eq.s32.totalorder %s32, 1
      %p212 = por %p210, %p211
      %p213 = scmp.ne.s32.totalorder %s204, %s205
      %p214 = scmp.eq.s32.totalorder %s32, 0
      %p215 = por %p213, %p214
      %p216 = scmp.ne.s32.totalorder %s204, %s205
      %p217 = scmp.eq.s32.totalorder %s33, 1
      %p218 = por %p216, %p217
      %p220 = scmp.ne.s32.totalorder %s205, %s219
      %p221 = scmp.eq.s32.totalorder %s33, 0
      %p222 = por %p220, %p221
      %s224 = sadd.s32 %s223, 1
      %p227 = scmp.eq.s32.totalorder %s27, 1
      %p228 = scmp.ne.s32.totalorder %s223, %s225
      %p229 = scmp.eq.s32.totalorder %s27, 0
      %p230 = por %p228, %p229
      %p231 = scmp.ne.s32.totalorder %s223, %s225
      %p232 = scmp.eq.s32.totalorder %s32, 1
      %p233 = por %p231, %p232
      %p234 = scmp.ne.s32.totalorder %s225, %s226
      %p235 = scmp.eq.s32.totalorder %s32, 0
      %p236 = por %p234, %p235
      %p237 = scmp.ne.s32.totalorder %s225, %s226
      %p238 = scmp.eq.s32.totalorder %s33, 1
      %p239 = por %p237, %p238
      %p241 = scmp.ne.s32.totalorder %s226, %s240
      %p242 = scmp.eq.s32.totalorder %s33, 0
      %p243 = por %p241, %p242
      %s245 = sadd.s32 %s244, 1
      %p248 = scmp.eq.s32.totalorder %s27, 1
      %p249 = scmp.ne.s32.totalorder %s244, %s246
      %p250 = scmp.eq.s32.totalorder %s27, 0
      %p251 = por %p249, %p250
      %p252 = scmp.ne.s32.totalorder %s244, %s246
      %p253 = scmp.eq.s32.totalorder %s32, 1
      %p254 = por %p252, %p253
      %p255 = scmp.ne.s32.totalorder %s246, %s247
      %p256 = scmp.eq.s32.totalorder %s32, 0
      %p257 = por %p255, %p256
      %p258 = scmp.ne.s32.totalorder %s246, %s247
      %p259 = scmp.eq.s32.totalorder %s33, 1
      %p260 = por %p258, %p259
      %p262 = scmp.ne.s32.totalorder %s247, %s261
      %p263 = scmp.eq.s32.totalorder %s33, 0
      %p264 = por %p262, %p263
      %s266 = sadd.s32 %s265, 1
      %p269 = scmp.eq.s32.totalorder %s27, 1
      %p270 = scmp.ne.s32.totalorder %s265, %s267
      %p271 = scmp.eq.s32.totalorder %s27, 0
      %p272 = por %p270, %p271
      %p273 = scmp.ne.s32.totalorder %s265, %s267
      %p274 = scmp.eq.s32.totalorder %s32, 1
      %p275 = por %p273, %p274
      %p276 = scmp.ne.s32.totalorder %s267, %s268
      %p277 = scmp.eq.s32.totalorder %s32, 0
      %p278 = por %p276, %p277
      %p279 = scmp.ne.s32.totalorder %s267, %s268
      %p280 = scmp.eq.s32.totalorder %s33, 1
      %p281 = por %p279, %p280
      %p283 = scmp.ne.s32.totalorder %s268, %s282
      %p284 = scmp.eq.s32.totalorder %s33, 0
      %p285 = por %p283, %p284
      %s287 = sadd.s32 %s286, 1
      %p290 = scmp.eq.s32.totalorder %s27, 1
      %p291 = scmp.ne.s32.totalorder %s286, %s288
      %p292 = scmp.eq.s32.totalorder %s27, 0
      %p293 = por %p291, %p292
      %p294 = scmp.ne.s32.totalorder %s286, %s288
      %p295 = scmp.eq.s32.totalorder %s32, 1
      %p296 = por %p294, %p295
      %p297 = scmp.ne.s32.totalorder %s288, %s289
      %p298 = scmp.eq.s32.totalorder %s32, 0
      %p299 = por %p297, %p298
      %p300 = scmp.ne.s32.totalorder %s288, %s289
      %p301 = scmp.eq.s32.totalorder %s33, 1
      %p302 = por %p300, %p301
      %p304 = scmp.ne.s32.totalorder %s289, %s303
      %p305 = scmp.eq.s32.totalorder %s33, 0
      %p306 = por %p304, %p305
      %s308 = sadd.s32 %s307, 1
      %p311 = scmp.eq.s32.totalorder %s27, 1
      %p312 = scmp.ne.s32.totalorder %s307, %s309
      %p313 = scmp.eq.s32.totalorder %s27, 0
      %p314 = por %p312, %p313
      %p315 = scmp.ne.s32.totalorder %s307, %s309
      %p316 = scmp.eq.s32.totalorder %s32, 1
      %p317 = por %p315, %p316
      %p318 = scmp.ne.s32.totalorder %s309, %s310
      %p319 = scmp.eq.s32.totalorder %s32, 0
      %p320 = por %p318, %p319
      %p321 = scmp.ne.s32.totalorder %s309, %s310
      %p322 = scmp.eq.s32.totalorder %s33, 1
      %p323 = por %p321, %p322
      %p325 = scmp.ne.s32.totalorder %s310, %s324
      %p326 = scmp.eq.s32.totalorder %s33, 0
      %p327 = por %p325, %p326
      %s329 = sadd.s32 %s328, 1
      %p332 = scmp.eq.s32.totalorder %s27, 1
      %p333 = scmp.ne.s32.totalorder %s328, %s330
      %p334 = scmp.eq.s32.totalorder %s27, 0
      %p335 = por %p333, %p334
      %p336 = scmp.ne.s32.totalorder %s328, %s330
      %p337 = scmp.eq.s32.totalorder %s32, 1
      %p338 = por %p336, %p337
      %p339 = scmp.ne.s32.totalorder %s330, %s331
      %p340 = scmp.eq.s32.totalorder %s32, 0
      %p341 = por %p339, %p340
      %p342 = scmp.ne.s32.totalorder %s330, %s331
      %p343 = scmp.eq.s32.totalorder %s33, 1
      %p344 = por %p342, %p343
      %p346 = scmp.ne.s32.totalorder %s331, %s345
      %p347 = scmp.eq.s32.totalorder %s33, 0
      %p348 = por %p346, %p347
      %s350 = sadd.s32 %s349, 1
      %p353 = scmp.eq.s32.totalorder %s27, 1
      %p354 = scmp.ne.s32.totalorder %s349, %s351
      %p355 = scmp.eq.s32.totalorder %s27, 0
      %p356 = por %p354, %p355
      %p357 = scmp.ne.s32.totalorder %s349, %s351
      %p358 = scmp.eq.s32.totalorder %s32, 1
      %p359 = por %p357, %p358
      %p360 = scmp.ne.s32.totalorder %s351, %s352
      %p361 = scmp.eq.s32.totalorder %s32, 0
      %p362 = por %p360, %p361
      %p363 = scmp.ne.s32.totalorder %s351, %s352
      %p364 = scmp.eq.s32.totalorder %s33, 1
      %p365 = por %p363, %p364
      %p367 = scmp.ne.s32.totalorder %s352, %s366
      %p368 = scmp.eq.s32.totalorder %s33, 0
      %p369 = por %p367, %p368
      %s371 = sadd.s32 %s370, 1
      %p374 = scmp.eq.s32.totalorder %s27, 1
      %p375 = scmp.ne.s32.totalorder %s370, %s372
      %p376 = scmp.eq.s32.totalorder %s27, 0
      %p377 = por %p375, %p376
      %p378 = scmp.ne.s32.totalorder %s370, %s372
      %p379 = scmp.eq.s32.totalorder %s32, 1
      %p380 = por %p378, %p379
      %p381 = scmp.ne.s32.totalorder %s372, %s373
      %p382 = scmp.eq.s32.totalorder %s32, 0
      %p383 = por %p381, %p382
      %p384 = scmp.ne.s32.totalorder %s372, %s373
      %p385 = scmp.eq.s32.totalorder %s33, 1
      %p386 = por %p384, %p385
      %p388 = scmp.ne.s32.totalorder %s373, %s387
      %p389 = scmp.eq.s32.totalorder %s33, 0
      %p390 = por %p388, %p389
      %s391 = ssub.s32 %s27, %s34
      %p392 = scmp.eq.s32.totalorder %s391, 0
      %s394 = sadd.s32 %s393, 1
      %s395 = scalar_select %p392, %s393, %s394
      %p398 = pneg %p392
      %p399 = scmp.eq.s32.totalorder %s27, 1
      %p400 = por %p398, %p399
      %p401 = scmp.ne.s32.totalorder %s393, %s396
      %p402 = scmp.eq.s32.totalorder %s27, 0
      %p403 = por %p401, %p402
      %p404 = scmp.ne.s32.totalorder %s393, %s396
      %p405 = scmp.eq.s32.totalorder %s32, 1
      %p406 = por %p404, %p405
      %p407 = scmp.ne.s32.totalorder %s396, %s397
      %p408 = scmp.eq.s32.totalorder %s32, 0
      %p409 = por %p407, %p408
      %p410 = scmp.ne.s32.totalorder %s396, %s397
      %p411 = scmp.eq.s32.totalorder %s33, 1
      %p412 = por %p410, %p411
      %p414 = scmp.ne.s32.totalorder %s397, %s413
      %p415 = scmp.eq.s32.totalorder %s33, 0
      %p416 = por %p414, %p415
      %p417 = scmp.le.s32.totalorder 1, %s27
      %p418 = scmp.lt.s32.totalorder %s27, 3
      %p419 = pnand %p417, %p418
      %p420 = pneg %p419
      // Predicated region
      $region9: #{tpu_custom_call.1} parent=5 // pred_check
        _
      $region10: #{tpu_custom_call.1} parent=5 // pred_check_branch
        %422 = sbr.rel (%p419) target = $region12
      $region11: #{tpu_custom_call.1} parent=5 // pred_region
        %s423 = ssub.s32 %s27, 1
        // Predicated region
        $region13: #{tpu_custom_call.1} parent=11 // pred_check
          %p424 = pneg %p152
        $region14: #{tpu_custom_call.1} parent=11 // pred_check_branch
          %426 = sbr.rel (%p424) target = $region16
        $region15: #{tpu_custom_call.1} parent=11 // pred_region
          _
        $region16: #{tpu_custom_call.1} parent=11 // pred_fallthru
          _
        // Predicated region
        $region17: #{tpu_custom_call.1} parent=11 // pred_check
          %p427 = pneg %p173
        $region18: #{tpu_custom_call.1} parent=11 // pred_check_branch
          %429 = sbr.rel (%p427) target = $region20
        $region19: #{tpu_custom_call.1} parent=11 // pred_region
          _
        $region20: #{tpu_custom_call.1} parent=11 // pred_fallthru
          _
        // Predicated region
        $region21: #{tpu_custom_call.1} parent=11 // pred_check
          %p430 = pneg %p194
        $region22: #{tpu_custom_call.1} parent=11 // pred_check_branch
          %432 = sbr.rel (%p430) target = $region24
        $region23: #{tpu_custom_call.1} parent=11 // pred_region
          _
        $region24: #{tpu_custom_call.1} parent=11 // pred_fallthru
          _
        // Predicated region
        $region25: #{tpu_custom_call.1} parent=11 // pred_check
          %p433 = pneg %p215
        $region26: #{tpu_custom_call.1} parent=11 // pred_check_branch
          %435 = sbr.rel (%p433) target = $region28
        $region27: #{tpu_custom_call.1} parent=11 // pred_region
          _
        $region28: #{tpu_custom_call.1} parent=11 // pred_fallthru
          _
        // Predicated region
        $region29: #{tpu_custom_call.1} parent=11 // pred_check
          %p436 = pneg %p236
        $region30: #{tpu_custom_call.1} parent=11 // pred_check_branch
          %438 = sbr.rel (%p436) target = $region32
        $region31: #{tpu_custom_call.1} parent=11 // pred_region
          _
        $region32: #{tpu_custom_call.1} parent=11 // pred_fallthru
          _
        // Predicated region
        $region33: #{tpu_custom_call.1} parent=11 // pred_check
          %p439 = pneg %p257
        $region34: #{tpu_custom_call.1} parent=11 // pred_check_branch
          %441 = sbr.rel (%p439) target = $region36
        $region35: #{tpu_custom_call.1} parent=11 // pred_region
          _
        $region36: #{tpu_custom_call.1} parent=11 // pred_fallthru
          _
        // Predicated region
        $region37: #{tpu_custom_call.1} parent=11 // pred_check
          %p442 = pneg %p278
        $region38: #{tpu_custom_call.1} parent=11 // pred_check_branch
          %444 = sbr.rel (%p442) target = $region40
        $region39: #{tpu_custom_call.1} parent=11 // pred_region
          _
        $region40: #{tpu_custom_call.1} parent=11 // pred_fallthru
          _
        // Predicated region
        $region41: #{tpu_custom_call.1} parent=11 // pred_check
          %p445 = pneg %p299
        $region42: #{tpu_custom_call.1} parent=11 // pred_check_branch
          %447 = sbr.rel (%p445) target = $region44
        $region43: #{tpu_custom_call.1} parent=11 // pred_region
          _
        $region44: #{tpu_custom_call.1} parent=11 // pred_fallthru
          _
        // Predicated region
        $region45: #{tpu_custom_call.1} parent=11 // pred_check
          %p448 = pneg %p320
        $region46: #{tpu_custom_call.1} parent=11 // pred_check_branch
          %450 = sbr.rel (%p448) target = $region48
        $region47: #{tpu_custom_call.1} parent=11 // pred_region
          _
        $region48: #{tpu_custom_call.1} parent=11 // pred_fallthru
          _
        // Predicated region
        $region49: #{tpu_custom_call.1} parent=11 // pred_check
          %p451 = pneg %p341
        $region50: #{tpu_custom_call.1} parent=11 // pred_check_branch
          %453 = sbr.rel (%p451) target = $region52
        $region51: #{tpu_custom_call.1} parent=11 // pred_region
          _
        $region52: #{tpu_custom_call.1} parent=11 // pred_fallthru
          _
        // Predicated region
        $region53: #{tpu_custom_call.1} parent=11 // pred_check
          %p454 = pneg %p362
        $region54: #{tpu_custom_call.1} parent=11 // pred_check_branch
          %456 = sbr.rel (%p454) target = $region56
        $region55: #{tpu_custom_call.1} parent=11 // pred_region
          _
        $region56: #{tpu_custom_call.1} parent=11 // pred_fallthru
          _
        // Predicated region
        $region57: #{tpu_custom_call.1} parent=11 // pred_check
          %p457 = pneg %p383
        $region58: #{tpu_custom_call.1} parent=11 // pred_check_branch
          %459 = sbr.rel (%p457) target = $region60
        $region59: #{tpu_custom_call.1} parent=11 // pred_region
          _
        $region60: #{tpu_custom_call.1} parent=11 // pred_fallthru
          _
      $region12: #{tpu_custom_call.1} parent=5 // pred_fallthru
        _
      %p460 = scmp.lt.s32.totalorder %s27, 2
      // Predicated region
      $region61: #{tpu_custom_call.1} parent=5 // pred_check
        %p461 = pneg %p460
      $region62: #{tpu_custom_call.1} parent=5 // pred_check_branch
        %463 = sbr.rel (%p461) target = $region64
      $region63: #{tpu_custom_call.1} parent=5 // pred_region
        // Predicated region
        $region65: #{tpu_custom_call.1} parent=63 // pred_check
          %p464 = pneg %p47
        $region66: #{tpu_custom_call.1} parent=63 // pred_check_branch
          %466 = sbr.rel (%p464) target = $region68
        $region67: #{tpu_custom_call.1} parent=63 // pred_region
          %s467 = smul.u32 8, %s27
          %p468 = scmp.lt.s32.totalorder %s467, 15
          %s469 = scalar_select %p468, %s467, 15
          %s470 = smul.addr %s469, 4
          %s471 = scalar_lea.vmem %s0, %s470
          %s472 = smul.u32 8, %s27
        $region68: #{tpu_custom_call.1} parent=63 // pred_fallthru
          _
        // Predicated region
        $region69: #{tpu_custom_call.1} parent=63 // pred_check
          %p473 = pneg %p73
        $region70: #{tpu_custom_call.1} parent=63 // pred_check_branch
          %475 = sbr.rel (%p473) target = $region72
        $region71: #{tpu_custom_call.1} parent=63 // pred_region
          %s476 = smul.u32 8, %s27
          %p477 = scmp.lt.s32.totalorder %s476, 15
          %s478 = scalar_select %p477, %s476, 15
          %s479 = smul.addr %s478, 4
          %s480 = scalar_lea.vmem %s1, %s479
          %s481 = smul.u32 8, %s27
        $region72: #{tpu_custom_call.1} parent=63 // pred_fallthru
          _
        // Predicated region
        $region73: #{tpu_custom_call.1} parent=63 // pred_check
          %p482 = pneg %p99
        $region74: #{tpu_custom_call.1} parent=63 // pred_check_branch
          %484 = sbr.rel (%p482) target = $region76
        $region75: #{tpu_custom_call.1} parent=63 // pred_region
          %s485 = smul.u32 8, %s27
          %p486 = scmp.lt.s32.totalorder %s485, 15
          %s487 = scalar_select %p486, %s485, 15
          %s488 = smul.addr %s487, 4
          %s489 = scalar_lea.vmem %s2, %s488
          %s490 = smul.u32 8, %s27
        $region76: #{tpu_custom_call.1} parent=63 // pred_fallthru
          _
        // Predicated region
        $region77: #{tpu_custom_call.1} parent=63 // pred_check
          %p491 = pneg %p125
        $region78: #{tpu_custom_call.1} parent=63 // pred_check_branch
          %493 = sbr.rel (%p491) target = $region80
        $region79: #{tpu_custom_call.1} parent=63 // pred_region
          %p494 = scmp.lt.s32.totalorder %s27, 1
          %s495 = scalar_select %p494, %s27, 1
          %s496 = smul.addr %s495, 8
          %s497 = scalar_lea.vmem %s3, %s496
        $region80: #{tpu_custom_call.1} parent=63 // pred_fallthru
          _
      $region64: #{tpu_custom_call.1} parent=5 // pred_fallthru
        _
      %p498 = scmp.le.s32.totalorder 1, %s27
      %p499 = scmp.lt.s32.totalorder %s27, 3
      %p500 = pnand %p498, %p499
      %p501 = pneg %p500
      // Predicated region
      $region81: #{tpu_custom_call.1} parent=5 // pred_check
        _
      $region82: #{tpu_custom_call.1} parent=5 // pred_check_branch
        %503 = sbr.rel (%p500) target = $region84
      $region83: #{tpu_custom_call.1} parent=5 // pred_region
        %s504 = ssub.s32 %s27, 1
        %s505 = smul.u32 8, %s32
        %p506 = scmp.lt.s32.totalorder %s505, 15
        %s507 = scalar_select %p506, %s505, 15
        %s508 = smul.addr %s507, 4
        %s509 = scalar_lea.vmem %s0, %s508
        %p510 = pneg %p53
        %p511 = pneg %p50
        %s512 = smul.u32 8, %s32
        %p513 = scmp.lt.s32.totalorder %s512, 15
        %s514 = scalar_select %p513, %s512, 15
        %s515 = smul.addr %s514, 4
        %s516 = scalar_lea.vmem %s1, %s515
        %p517 = pneg %p79
        %p518 = pneg %p76
        %s519 = smul.u32 8, %s32
        %p520 = scmp.lt.s32.totalorder %s519, 15
        %s521 = scalar_select %p520, %s519, 15
        %s522 = smul.addr %s521, 4
        %s523 = scalar_lea.vmem %s2, %s522
        %p524 = pneg %p105
        %p525 = pneg %p102
        %p526 = scmp.lt.s32.totalorder %s32, 1
        %s527 = scalar_select %p526, %s32, 1
        %s528 = smul.addr %s527, 8
        %s529 = scalar_lea.vmem %s3, %s528
        %p530 = pneg %p131
        %p531 = pneg %p128
        %p532 = pneg %p152
        %p533 = pneg %p149
        %p534 = pneg %p173
        %p535 = pneg %p170
        %p536 = pneg %p194
        %p537 = pneg %p191
        %p538 = pneg %p215
        %p539 = pneg %p212
        %p540 = pneg %p236
        %p541 = pneg %p233
        %p542 = pneg %p257
        %p543 = pneg %p254
        %p544 = pneg %p278
        %p545 = pneg %p275
        %p546 = pneg %p299
        %p547 = pneg %p296
        %p548 = pneg %p320
        %p549 = pneg %p317
        %p550 = pneg %p341
        %p551 = pneg %p338
        %p552 = pneg %p362
        %p553 = pneg %p359
        %p554 = pneg %p383
        %p555 = pneg %p380
        %p556 = pneg %p409
        %p557 = pneg %p406
        %s558 = sand.u32 %s396, 1
        %s559 = scalar_lea.sflag [#allocation4], %s558
        %s560 = sand.u32 %s396, 1
        %s561 = smul.addr %s560, 8
        %s562 = scalar_lea.vmem [#allocation3], %s561
        %s563 = smul.u32 8, %s32
        %p564 = scmp.lt.s32.totalorder %s563, 15
        %s565 = scalar_select %p564, %s563, 15
        %s566 = smul.addr %s565, 4
        %s567 = scalar_lea.vmem %s0, %s566
        %s568 = smul.u32 8, %s32
        %s569 = smul.u32 8, %s32
        %p570 = scmp.lt.s32.totalorder %s569, 15
        %s571 = scalar_select %p570, %s569, 15
        %s572 = smul.addr %s571, 4
        %s573 = scalar_lea.vmem %s1, %s572
        %s574 = smul.u32 8, %s32
        %s575 = smul.u32 8, %s32
        %p576 = scmp.lt.s32.totalorder %s575, 15
        %s577 = scalar_select %p576, %s575, 15
        %s578 = smul.addr %s577, 4
        %s579 = scalar_lea.vmem %s2, %s578
        %s580 = smul.u32 8, %s32
        %p581 = scmp.lt.s32.totalorder %s32, 1
        %s582 = scalar_select %p581, %s32, 1
        %s583 = smul.addr %s582, 8
        %s584 = scalar_lea.vmem %s3, %s583
        %v585 = vld [vmem:[%s567] sm:$0xf]
        %v586 = vld [vmem:[%s567 + $0x4] sm:$0xf]
        %v587 = vld [vmem:[%s567 + $0x8] sm:$0xf]
        %v588 = vld [vmem:[%s567 + $0xc] sm:$0xf]
        %v589 = vld [vmem:[%s567 + $0x10] sm:$0xf]
        %v590 = vld [vmem:[%s567 + $0x14] sm:$0xf]
        %v591 = vld [vmem:[%s567 + $0x18] sm:$0xf]
        %v592 = vld [vmem:[%s567 + $0x1c] sm:$0xf]
        %v593 = vunpack.c.l.bf16 %v585
        %v594 = vunpack.c.l.bf16 %v586
        %v595 = vunpack.c.l.bf16 %v587
        %v596 = vunpack.c.l.bf16 %v588
        %v597 = vunpack.c.l.bf16 %v589
        %v598 = vunpack.c.l.bf16 %v590
        %v599 = vunpack.c.l.bf16 %v591
        %v600 = vunpack.c.l.bf16 %v592
        %v601 = vld [vmem:[%s573] sm:$0xf]
        %v602 = vld [vmem:[%s573 + $0x4] sm:$0xf]
        %v603 = vld [vmem:[%s573 + $0x8] sm:$0xf]
        %v604 = vld [vmem:[%s573 + $0xc] sm:$0xf]
        %v605 = vld [vmem:[%s573 + $0x10] sm:$0xf]
        %v606 = vld [vmem:[%s573 + $0x14] sm:$0xf]
        %v607 = vld [vmem:[%s573 + $0x18] sm:$0xf]
        %v608 = vld [vmem:[%s573 + $0x1c] sm:$0xf]
        %v609 = vunpack.c.l.bf16 %v601
        %v610 = vunpack.c.l.bf16 %v602
        %v611 = vunpack.c.l.bf16 %v603
        %v612 = vunpack.c.l.bf16 %v604
        %v613 = vunpack.c.l.bf16 %v605
        %v614 = vunpack.c.l.bf16 %v606
        %v615 = vunpack.c.l.bf16 %v607
        %v616 = vunpack.c.l.bf16 %v608
        %v617 = vld [vmem:[%s579] sm:$0xf]
        %v618 = vld [vmem:[%s579 + $0x4] sm:$0xf]
        %v619 = vld [vmem:[%s579 + $0x8] sm:$0xf]
        %v620 = vld [vmem:[%s579 + $0xc] sm:$0xf]
        %v621 = vld [vmem:[%s579 + $0x10] sm:$0xf]
        %v622 = vld [vmem:[%s579 + $0x14] sm:$0xf]
        %v623 = vld [vmem:[%s579 + $0x18] sm:$0xf]
        %v624 = vld [vmem:[%s579 + $0x1c] sm:$0xf]
        %v625 = vunpack.c.l.bf16 %v617
        %v626 = vunpack.c.l.bf16 %v618
        %v627 = vunpack.c.l.bf16 %v619
        %v628 = vunpack.c.l.bf16 %v620
        %v629 = vunpack.c.l.bf16 %v621
        %v630 = vunpack.c.l.bf16 %v622
        %v631 = vunpack.c.l.bf16 %v623
        %v632 = vunpack.c.l.bf16 %v624
        %v633 = vadd.f32 %v593, %v609
        %v634 = vadd.f32 %v594, %v610
        %v635 = vadd.f32 %v595, %v611
        %v636 = vadd.f32 %v596, %v612
        %v637 = vadd.f32 %v597, %v613
        %v638 = vadd.f32 %v598, %v614
        %v639 = vadd.f32 %v599, %v615
        %v640 = vadd.f32 %v600, %v616
        %v641 = vld [vmem:[%s4] sm:$0xff]
        %v642 = vld [vmem:[%s4 + $0x8] sm:$0xff]
        %v643 = vld [vmem:[%s4 + $0x10] sm:$0xff]
        %v644 = vld [vmem:[%s4 + $0x18] sm:$0xff]
        %v645 = vld [vmem:[%s5] sm:$0xff]
        %v646 = vld [vmem:[%s5 + $0x8] sm:$0xff]
        %v647 = vld [vmem:[%s5 + $0x10] sm:$0xff]
        %v648 = vld [vmem:[%s5 + $0x18] sm:$0xff]
        %vm649 = vcmask 261120
        %v651 = vsel %vm649, %v625, 0
        %v654 = vsel %vm649, %v626, 0
        %v657 = vsel %vm649, %v627, 0
        %v660 = vsel %vm649, %v628, 0
        %v663 = vsel %vm649, %v629, 0
        %v666 = vsel %vm649, %v630, 0
        %v669 = vsel %vm649, %v631, 0
        %v672 = vsel %vm649, %v632, 0
        %674 = vmatprep.subr.mxu0 0.0
        %675 = vmatpush1.msra.mxu0 %v645
        %676 = vmatprep.subr.mxu0 0.0
        %677 = vmatpush1.msra.mxu0 %v646
        %678 = vmatprep.subr.mxu0 0.0
        %679 = vmatpush1.msra.mxu0 %v647
        %680 = vmatprep.subr.mxu0 0.0
        %681 = vmatpush1.msra.mxu0 %v648
        %682 = vmatprep.subr.mxu0 0.0
        %683 = vmatpush1.msra.mxu0 0.0
        %684 = vmatprep.subr.mxu0 0.0
        %685 = vmatpush1.msra.mxu0 0.0
        %686 = vmatprep.subr.mxu0 0.0
        %687 = vmatpush1.msra.mxu0 0.0
        %688 = vmatprep.subr.mxu0 0.0
        %689 = vmatpush1.msra.mxu0 0.0
        %690 = vmatprep.subr.mxu0 0.0
        %691 = vmatpush1.msra.mxu0 0.0
        %692 = vmatprep.subr.mxu0 0.0
        %693 = vmatpush1.msra.mxu0 0.0
        %694 = vmatprep.subr.mxu0 0.0
        %695 = vmatpush1.msra.mxu0 0.0
        %696 = vmatprep.subr.mxu0 0.0
        %697 = vmatpush1.msra.mxu0 0.0
        %698 = vmatprep.subr.mxu0 0.0
        %699 = vmatpush1.msra.mxu0 0.0
        %700 = vmatprep.subr.mxu0 0.0
        %701 = vmatpush1.msra.mxu0 0.0
        %702 = vmatprep.subr.mxu0 0.0
        %703 = vmatpush1.msra.mxu0 0.0
        %704 = vmatprep.subr.mxu0 0.0
        %705 = vmatpush1.msra.mxu0 0.0
        %706 = vmatprep.subr.mxu0 0.0
        %707 = vmatpush1.msra.mxu0 0.0
        %708 = vmatprep.subr.mxu0 0.0
        %709 = vmatpush1.msra.mxu0 0.0
        %710 = vmatprep.subr.mxu0 0.0
        %711 = vmatpush1.msra.mxu0 0.0
        %712 = vmatprep.subr.mxu0 0.0
        %713 = vmatpush1.msra.mxu0 0.0
        %714 = vmatprep.subr.mxu0 0.0
        %715 = vmatpush1.msra.mxu0 0.0
        %716 = vmatprep.subr.mxu0 0.0
        %717 = vmatpush1.msra.mxu0 0.0
        %718 = vmatprep.subr.mxu0 0.0
        %719 = vmatpush1.msra.mxu0 0.0
        %720 = vmatprep.subr.mxu0 0.0
        %721 = vmatpush1.msra.mxu0 0.0
        %722 = vmatprep.subr.mxu0 0.0
        %723 = vmatpush1.msra.mxu0 0.0
        %724 = vmatprep.subr.mxu0 0.0
        %725 = vmatpush1.msra.mxu0 0.0
        %726 = vmatprep.subr.mxu0 0.0
        %727 = vmatpush1.msra.mxu0 0.0
        %728 = vmatprep.subr.mxu0 0.0
        %729 = vmatpush1.msra.mxu0 0.0
        %730 = vmatprep.subr.mxu0 0.0
        %731 = vmatpush1.msra.mxu0 0.0
        %732 = vmatprep.subr.mxu0 0.0
        %733 = vmatpush1.msra.mxu0 0.0
        %734 = vmatprep.subr.mxu0 0.0
        %735 = vmatpush1.msra.mxu0 0.0
        %736 = vmatprep.subr.mxu0 0.0
        %737 = vmatpush1.msra.mxu0 0.0
        %738 = vmatprep.mubr.f32.mxu0 0.0
        %739 = vmatmul.mubr.f32.gmra.mrb[0].mxu0 %v651
        %v740 = vpop.f32.mrb[0].mxu0
        %v741 = vadd.f32 0.0, %v740
        %v742 = vpop.f32.mrb[0].mxu0
        %743 = vmatprep.mubr.f32.mxu0 0.0
        %744 = vmatmul.mubr.f32.gmra.mrb[0].mxu0 %v654
        %v745 = vpop.f32.mrb[0].mxu0
        %v746 = vadd.f32 0.0, %v745
        %v747 = vpop.f32.mrb[0].mxu0
        %748 = vmatprep.mubr.f32.mxu0 0.0
        %749 = vmatmul.mubr.f32.gmra.mrb[0].mxu0 %v657
        %v750 = vpop.f32.mrb[0].mxu0
        %v751 = vadd.f32 0.0, %v750
        %v752 = vpop.f32.mrb[0].mxu0
        %753 = vmatprep.mubr.f32.mxu0 0.0
        %754 = vmatmul.mubr.f32.gmra.mrb[0].mxu0 %v660
        %v755 = vpop.f32.mrb[0].mxu0
        %v756 = vadd.f32 0.0, %v755
        %v757 = vpop.f32.mrb[0].mxu0
        %758 = vmatprep.mubr.f32.mxu0 0.0
        %759 = vmatmul.mubr.f32.gmra.mrb[0].mxu0 %v663
        %v760 = vpop.f32.mrb[0].mxu0
        %v761 = vadd.f32 0.0, %v760
        %v762 = vpop.f32.mrb[0].mxu0
        %763 = vmatprep.mubr.f32.mxu0 0.0
        %764 = vmatmul.mubr.f32.gmra.mrb[0].mxu0 %v666
        %v765 = vpop.f32.mrb[0].mxu0
        %v766 = vadd.f32 0.0, %v765
        %v767 = vpop.f32.mrb[0].mxu0
        %768 = vmatprep.mubr.f32.mxu0 0.0
        %769 = vmatmul.mubr.f32.gmra.mrb[0].mxu0 %v669
        %v770 = vpop.f32.mrb[0].mxu0
        %v771 = vadd.f32 0.0, %v770
        %v772 = vpop.f32.mrb[0].mxu0
        %773 = vmatprep.mubr.f32.mxu0 0.0
        %774 = vmatmul.mubr.f32.gmra.mrb[0].mxu0 %v672
        %v775 = vpop.f32.mrb[0].mxu0
        %v776 = vadd.f32 0.0, %v775
        %v777 = vpop.f32.mrb[0].mxu0
        %778 = vdwg.mxu0
        %v780 = vsel %vm649, %v633, 0
        %v783 = vsel %vm649, %v634, 0
        %v786 = vsel %vm649, %v635, 0
        %v789 = vsel %vm649, %v636, 0
        %v792 = vsel %vm649, %v637, 0
        %v795 = vsel %vm649, %v638, 0
        %v798 = vsel %vm649, %v639, 0
        %v801 = vsel %vm649, %v640, 0
        %803 = vmatprep.subr.mxu0 0.0
        %804 = vmatpush1.msra.mxu0 %v641
        %805 = vmatprep.subr.mxu0 0.0
        %806 = vmatpush1.msra.mxu0 %v642
        %807 = vmatprep.subr.mxu0 0.0
        %808 = vmatpush1.msra.mxu0 %v643
        %809 = vmatprep.subr.mxu0 0.0
        %810 = vmatpush1.msra.mxu0 %v644
        %811 = vmatprep.subr.mxu0 0.0
        %812 = vmatpush1.msra.mxu0 0.0
        %813 = vmatprep.subr.mxu0 0.0
        %814 = vmatpush1.msra.mxu0 0.0
        %815 = vmatprep.subr.mxu0 0.0
        %816 = vmatpush1.msra.mxu0 0.0
        %817 = vmatprep.subr.mxu0 0.0
        %818 = vmatpush1.msra.mxu0 0.0
        %819 = vmatprep.subr.mxu0 0.0
        %820 = vmatpush1.msra.mxu0 0.0
        %821 = vmatprep.subr.mxu0 0.0
        %822 = vmatpush1.msra.mxu0 0.0
        %823 = vmatprep.subr.mxu0 0.0
        %824 = vmatpush1.msra.mxu0 0.0
        %825 = vmatprep.subr.mxu0 0.0
        %826 = vmatpush1.msra.mxu0 0.0
        %827 = vmatprep.subr.mxu0 0.0
        %828 = vmatpush1.msra.mxu0 0.0
        %829 = vmatprep.subr.mxu0 0.0
        %830 = vmatpush1.msra.mxu0 0.0
        %831 = vmatprep.subr.mxu0 0.0
        %832 = vmatpush1.msra.mxu0 0.0
        %833 = vmatprep.subr.mxu0 0.0
        %834 = vmatpush1.msra.mxu0 0.0
        %835 = vmatprep.subr.mxu0 0.0
        %836 = vmatpush1.msra.mxu0 0.0
        %837 = vmatprep.subr.mxu0 0.0
        %838 = vmatpush1.msra.mxu0 0.0
        %839 = vmatprep.subr.mxu0 0.0
        %840 = vmatpush1.msra.mxu0 0.0
        %841 = vmatprep.subr.mxu0 0.0
        %842 = vmatpush1.msra.mxu0 0.0
        %843 = vmatprep.subr.mxu0 0.0
        %844 = vmatpush1.msra.mxu0 0.0
        %845 = vmatprep.subr.mxu0 0.0
        %846 = vmatpush1.msra.mxu0 0.0
        %847 = vmatprep.subr.mxu0 0.0
        %848 = vmatpush1.msra.mxu0 0.0
        %849 = vmatprep.subr.mxu0 0.0
        %850 = vmatpush1.msra.mxu0 0.0
        %851 = vmatprep.subr.mxu0 0.0
        %852 = vmatpush1.msra.mxu0 0.0
        %853 = vmatprep.subr.mxu0 0.0
        %854 = vmatpush1.msra.mxu0 0.0
        %855 = vmatprep.subr.mxu0 0.0
        %856 = vmatpush1.msra.mxu0 0.0
        %857 = vmatprep.subr.mxu0 0.0
        %858 = vmatpush1.msra.mxu0 0.0
        %859 = vmatprep.subr.mxu0 0.0
        %860 = vmatpush1.msra.mxu0 0.0
        %861 = vmatprep.subr.mxu0 0.0
        %862 = vmatpush1.msra.mxu0 0.0
        %863 = vmatprep.subr.mxu0 0.0
        %864 = vmatpush1.msra.mxu0 0.0
        %865 = vmatprep.subr.mxu0 0.0
        %866 = vmatpush1.msra.mxu0 0.0
        %867 = vmatprep.mubr.f32.mxu0 0.0
        %868 = vmatmul.mubr.f32.gmra.mrb[0].mxu0 %v780
        %v869 = vpop.f32.mrb[0].mxu0
        %v870 = vadd.f32 %v741, %v869
        %v871 = vpop.f32.mrb[0].mxu0
        %872 = vmatprep.mubr.f32.mxu0 0.0
        %873 = vmatmul.mubr.f32.gmra.mrb[0].mxu0 %v783
        %v874 = vpop.f32.mrb[0].mxu0
        %v875 = vadd.f32 %v746, %v874
        %v876 = vpop.f32.mrb[0].mxu0
        %877 = vmatprep.mubr.f32.mxu0 0.0
        %878 = vmatmul.mubr.f32.gmra.mrb[0].mxu0 %v786
        %v879 = vpop.f32.mrb[0].mxu0
        %v880 = vadd.f32 %v751, %v879
        %v881 = vpop.f32.mrb[0].mxu0
        %882 = vmatprep.mubr.f32.mxu0 0.0
        %883 = vmatmul.mubr.f32.gmra.mrb[0].mxu0 %v789
        %v884 = vpop.f32.mrb[0].mxu0
        %v885 = vadd.f32 %v756, %v884
        %v886 = vpop.f32.mrb[0].mxu0
        %887 = vmatprep.mubr.f32.mxu0 0.0
        %888 = vmatmul.mubr.f32.gmra.mrb[0].mxu0 %v792
        %v889 = vpop.f32.mrb[0].mxu0
        %v890 = vadd.f32 %v761, %v889
        %v891 = vpop.f32.mrb[0].mxu0
        %892 = vmatprep.mubr.f32.mxu0 0.0
        %893 = vmatmul.mubr.f32.gmra.mrb[0].mxu0 %v795
        %v894 = vpop.f32.mrb[0].mxu0
        %v895 = vadd.f32 %v766, %v894
        %v896 = vpop.f32.mrb[0].mxu0
        %897 = vmatprep.mubr.f32.mxu0 0.0
        %898 = vmatmul.mubr.f32.gmra.mrb[0].mxu0 %v798
        %v899 = vpop.f32.mrb[0].mxu0
        %v900 = vadd.f32 %v771, %v899
        %v901 = vpop.f32.mrb[0].mxu0
        %902 = vmatprep.mubr.f32.mxu0 0.0
        %903 = vmatmul.mubr.f32.gmra.mrb[0].mxu0 %v801
        %v904 = vpop.f32.mrb[0].mxu0
        %v905 = vadd.f32 %v776, %v904
        %v906 = vpop.f32.mrb[0].mxu0
        %907 = vdwg.mxu0
        %v908 = vld [vmem:[%s6] sm:$0x1]
        %v910 = vlaneseq
        %v911 = vshrl.u32 %v910, 7
        %v912 = vsub.s32 0, %v911
        %v913 = vrot.slane %v908, %v912
        %v915 = vadd.f32 %v870, %v913
        %v916 = vadd.f32 %v875, %v913
        %v917 = vadd.f32 %v880, %v913
        %v918 = vadd.f32 %v885, %v913
        %v919 = vadd.f32 %v890, %v913
        %v920 = vadd.f32 %v895, %v913
        %v921 = vadd.f32 %v900, %v913
        %v922 = vadd.f32 %v905, %v913
        %v923 = vmax.f32 %v915, 0.0
        %v924 = vmax.f32 %v916, 0.0
        %v925 = vmax.f32 %v917, 0.0
        %v926 = vmax.f32 %v918, 0.0
        %v927 = vmax.f32 %v919, 0.0
        %v928 = vmax.f32 %v920, 0.0
        %v929 = vmax.f32 %v921, 0.0
        %v930 = vmax.f32 %v922, 0.0
        %v931 = vld [vmem:[%s7] sm:$0xff]
        %v932 = vld [vmem:[%s7 + $0x8] sm:$0xff]
        %v933 = vld [vmem:[%s7 + $0x10] sm:$0xff]
        %v934 = vld [vmem:[%s7 + $0x18] sm:$0xff]
        %v935 = vld [vmem:[%s8] sm:$0x1]
        %v937 = vlaneseq
        %v938 = vshrl.u32 %v937, 7
        %v939 = vsub.s32 0, %v938
        %v940 = vrot.slane %v935, %v939
        %v943 = vsel %vm649, %v923, 0
        %v946 = vsel %vm649, %v924, 0
        %v949 = vsel %vm649, %v925, 0
        %v952 = vsel %vm649, %v926, 0
        %v955 = vsel %vm649, %v927, 0
        %v958 = vsel %vm649, %v928, 0
        %v961 = vsel %vm649, %v929, 0
        %v964 = vsel %vm649, %v930, 0
        %966 = vmatprep.subr.mxu0 0.0
        %967 = vmatpush1.msra.mxu0 %v931
        %968 = vmatprep.subr.mxu0 0.0
        %969 = vmatpush1.msra.mxu0 %v932
        %970 = vmatprep.subr.mxu0 0.0
        %971 = vmatpush1.msra.mxu0 %v933
        %972 = vmatprep.subr.mxu0 0.0
        %973 = vmatpush1.msra.mxu0 %v934
        %974 = vmatprep.subr.mxu0 0.0
        %975 = vmatpush1.msra.mxu0 0.0
        %976 = vmatprep.subr.mxu0 0.0
        %977 = vmatpush1.msra.mxu0 0.0
        %978 = vmatprep.subr.mxu0 0.0
        %979 = vmatpush1.msra.mxu0 0.0
        %980 = vmatprep.subr.mxu0 0.0
        %981 = vmatpush1.msra.mxu0 0.0
        %982 = vmatprep.subr.mxu0 0.0
        %983 = vmatpush1.msra.mxu0 0.0
        %984 = vmatprep.subr.mxu0 0.0
        %985 = vmatpush1.msra.mxu0 0.0
        %986 = vmatprep.subr.mxu0 0.0
        %987 = vmatpush1.msra.mxu0 0.0
        %988 = vmatprep.subr.mxu0 0.0
        %989 = vmatpush1.msra.mxu0 0.0
        %990 = vmatprep.subr.mxu0 0.0
        %991 = vmatpush1.msra.mxu0 0.0
        %992 = vmatprep.subr.mxu0 0.0
        %993 = vmatpush1.msra.mxu0 0.0
        %994 = vmatprep.subr.mxu0 0.0
        %995 = vmatpush1.msra.mxu0 0.0
        %996 = vmatprep.subr.mxu0 0.0
        %997 = vmatpush1.msra.mxu0 0.0
        %998 = vmatprep.subr.mxu0 0.0
        %999 = vmatpush1.msra.mxu0 0.0
        %1000 = vmatprep.subr.mxu0 0.0
        %1001 = vmatpush1.msra.mxu0 0.0
        %1002 = vmatprep.subr.mxu0 0.0
        %1003 = vmatpush1.msra.mxu0 0.0
        %1004 = vmatprep.subr.mxu0 0.0
        %1005 = vmatpush1.msra.mxu0 0.0
        %1006 = vmatprep.subr.mxu0 0.0
        %1007 = vmatpush1.msra.mxu0 0.0
        %1008 = vmatprep.subr.mxu0 0.0
        %1009 = vmatpush1.msra.mxu0 0.0
        %1010 = vmatprep.subr.mxu0 0.0
        %1011 = vmatpush1.msra.mxu0 0.0
        %1012 = vmatprep.subr.mxu0 0.0
        %1013 = vmatpush1.msra.mxu0 0.0
        %1014 = vmatprep.subr.mxu0 0.0
        %1015 = vmatpush1.msra.mxu0 0.0
        %1016 = vmatprep.subr.mxu0 0.0
        %1017 = vmatpush1.msra.mxu0 0.0
        %1018 = vmatprep.subr.mxu0 0.0
        %1019 = vmatpush1.msra.mxu0 0.0
        %1020 = vmatprep.subr.mxu0 0.0
        %1021 = vmatpush1.msra.mxu0 0.0
        %1022 = vmatprep.subr.mxu0 0.0
        %1023 = vmatpush1.msra.mxu0 0.0
        %1024 = vmatprep.subr.mxu0 0.0
        %1025 = vmatpush1.msra.mxu0 0.0
        %1026 = vmatprep.subr.mxu0 0.0
        %1027 = vmatpush1.msra.mxu0 0.0
        %1028 = vmatprep.subr.mxu0 0.0
        %1029 = vmatpush1.msra.mxu0 0.0
        %1030 = vmatprep.mubr.f32.mxu0 0.0
        %1031 = vmatmul.mubr.f32.gmra.mrb[0].mxu0 %v943
        %v1032 = vpop.f32.mrb[0].mxu0
        %v1033 = vadd.f32 %v940, %v1032
        %v1034 = vpop.f32.mrb[0].mxu0
        %1035 = vmatprep.mubr.f32.mxu0 0.0
        %1036 = vmatmul.mubr.f32.gmra.mrb[0].mxu0 %v946
        %v1037 = vpop.f32.mrb[0].mxu0
        %v1038 = vadd.f32 %v940, %v1037
        %v1039 = vpop.f32.mrb[0].mxu0
        %1040 = vmatprep.mubr.f32.mxu0 0.0
        %1041 = vmatmul.mubr.f32.gmra.mrb[0].mxu0 %v949
        %v1042 = vpop.f32.mrb[0].mxu0
        %v1043 = vadd.f32 %v940, %v1042
        %v1044 = vpop.f32.mrb[0].mxu0
        %1045 = vmatprep.mubr.f32.mxu0 0.0
        %1046 = vmatmul.mubr.f32.gmra.mrb[0].mxu0 %v952
        %v1047 = vpop.f32.mrb[0].mxu0
        %v1048 = vadd.f32 %v940, %v1047
        %v1049 = vpop.f32.mrb[0].mxu0
        %1050 = vmatprep.mubr.f32.mxu0 0.0
        %1051 = vmatmul.mubr.f32.gmra.mrb[0].mxu0 %v955
        %v1052 = vpop.f32.mrb[0].mxu0
        %v1053 = vadd.f32 %v940, %v1052
        %v1054 = vpop.f32.mrb[0].mxu0
        %1055 = vmatprep.mubr.f32.mxu0 0.0
        %1056 = vmatmul.mubr.f32.gmra.mrb[0].mxu0 %v958
        %v1057 = vpop.f32.mrb[0].mxu0
        %v1058 = vadd.f32 %v940, %v1057
        %v1059 = vpop.f32.mrb[0].mxu0
        %1060 = vmatprep.mubr.f32.mxu0 0.0
        %1061 = vmatmul.mubr.f32.gmra.mrb[0].mxu0 %v961
        %v1062 = vpop.f32.mrb[0].mxu0
        %v1063 = vadd.f32 %v940, %v1062
        %v1064 = vpop.f32.mrb[0].mxu0
        %1065 = vmatprep.mubr.f32.mxu0 0.0
        %1066 = vmatmul.mubr.f32.gmra.mrb[0].mxu0 %v964
        %v1067 = vpop.f32.mrb[0].mxu0
        %v1068 = vadd.f32 %v940, %v1067
        %v1069 = vpop.f32.mrb[0].mxu0
        %1070 = vdwg.mxu0
        %v1071 = vmax.f32 %v1033, 0.0
        %v1072 = vmax.f32 %v1038, 0.0
        %v1073 = vmax.f32 %v1043, 0.0
        %v1074 = vmax.f32 %v1048, 0.0
        %v1075 = vmax.f32 %v1053, 0.0
        %v1076 = vmax.f32 %v1058, 0.0
        %v1077 = vmax.f32 %v1063, 0.0
        %v1078 = vmax.f32 %v1068, 0.0
        %v1079 = vld [vmem:[%s584] sm:$0xff]
        %v1080 = vld [vmem:[%s10] sm:$0xff]
        %v1081 = vld [vmem:[%s10 + $0x8] sm:$0xff]
        %v1082 = vld [vmem:[%s10 + $0x10] sm:$0xff]
        %v1083 = vld [vmem:[%s10 + $0x18] sm:$0xff]
        %v1084 = vld [vmem:[%s11] sm:$0x1]
        %v1086 = vlaneseq
        %v1087 = vshrl.u32 %v1086, 7
        %v1088 = vsub.s32 0, %v1087
        %v1089 = vrot.slane %v1084, %v1088
        %v1092 = vsel %vm649, %v1079, 0
        %1094 = vmatprep.subr.mxu0 0.0
        %1095 = vmatpush1.msra.mxu0 %v1080
        %1096 = vmatprep.subr.mxu0 0.0
        %1097 = vmatpush1.msra.mxu0 %v1081
        %1098 = vmatprep.subr.mxu0 0.0
        %1099 = vmatpush1.msra.mxu0 %v1082
        %1100 = vmatprep.subr.mxu0 0.0
        %1101 = vmatpush1.msra.mxu0 %v1083
        %1102 = vmatprep.subr.mxu0 0.0
        %1103 = vmatpush1.msra.mxu0 0.0
        %1104 = vmatprep.subr.mxu0 0.0
        %1105 = vmatpush1.msra.mxu0 0.0
        %1106 = vmatprep.subr.mxu0 0.0
        %1107 = vmatpush1.msra.mxu0 0.0
        %1108 = vmatprep.subr.mxu0 0.0
        %1109 = vmatpush1.msra.mxu0 0.0
        %1110 = vmatprep.subr.mxu0 0.0
        %1111 = vmatpush1.msra.mxu0 0.0
        %1112 = vmatprep.subr.mxu0 0.0
        %1113 = vmatpush1.msra.mxu0 0.0
        %1114 = vmatprep.subr.mxu0 0.0
        %1115 = vmatpush1.msra.mxu0 0.0
        %1116 = vmatprep.subr.mxu0 0.0
        %1117 = vmatpush1.msra.mxu0 0.0
        %1118 = vmatprep.subr.mxu0 0.0
        %1119 = vmatpush1.msra.mxu0 0.0
        %1120 = vmatprep.subr.mxu0 0.0
        %1121 = vmatpush1.msra.mxu0 0.0
        %1122 = vmatprep.subr.mxu0 0.0
        %1123 = vmatpush1.msra.mxu0 0.0
        %1124 = vmatprep.subr.mxu0 0.0
        %1125 = vmatpush1.msra.mxu0 0.0
        %1126 = vmatprep.subr.mxu0 0.0
        %1127 = vmatpush1.msra.mxu0 0.0
        %1128 = vmatprep.subr.mxu0 0.0
        %1129 = vmatpush1.msra.mxu0 0.0
        %1130 = vmatprep.subr.mxu0 0.0
        %1131 = vmatpush1.msra.mxu0 0.0
        %1132 = vmatprep.subr.mxu0 0.0
        %1133 = vmatpush1.msra.mxu0 0.0
        %1134 = vmatprep.subr.mxu0 0.0
        %1135 = vmatpush1.msra.mxu0 0.0
        %1136 = vmatprep.subr.mxu0 0.0
        %1137 = vmatpush1.msra.mxu0 0.0
        %1138 = vmatprep.subr.mxu0 0.0
        %1139 = vmatpush1.msra.mxu0 0.0
        %1140 = vmatprep.subr.mxu0 0.0
        %1141 = vmatpush1.msra.mxu0 0.0
        %1142 = vmatprep.subr.mxu0 0.0
        %1143 = vmatpush1.msra.mxu0 0.0
        %1144 = vmatprep.subr.mxu0 0.0
        %1145 = vmatpush1.msra.mxu0 0.0
        %1146 = vmatprep.subr.mxu0 0.0
        %1147 = vmatpush1.msra.mxu0 0.0
        %1148 = vmatprep.subr.mxu0 0.0
        %1149 = vmatpush1.msra.mxu0 0.0
        %1150 = vmatprep.subr.mxu0 0.0
        %1151 = vmatpush1.msra.mxu0 0.0
        %1152 = vmatprep.subr.mxu0 0.0
        %1153 = vmatpush1.msra.mxu0 0.0
        %1154 = vmatprep.subr.mxu0 0.0
        %1155 = vmatpush1.msra.mxu0 0.0
        %1156 = vmatprep.subr.mxu0 0.0
        %1157 = vmatpush1.msra.mxu0 0.0
        %1158 = vmatprep.mubr.f32.mxu0 0.0
        %1159 = vmatmul.mubr.f32.gmra.mrb[0].mxu0 %v1092
        %v1160 = vpop.f32.mrb[0].mxu0
        %v1161 = vadd.f32 %v1089, %v1160
        %v1162 = vpop.f32.mrb[0].mxu0
        %1163 = vdwg.mxu0
        %v1165 = vcombine.high %v1161, %v1161
        %v1167 = vunpack.c.l.s4 1966171168
        %v1168 = vunpack.c.0.s8 %v1167
        %v1169 = vlaneseq
        %v1170 = vshrl.u32 %v1169, 7
        %v1171 = vsub.s32 %v1168, %v1170
        %v1172 = vrot.slane %v1161, %v1171
        %v1174 = vunpack.c.l.s4 1966171168
        %v1175 = vunpack.c.0.s8 %v1174
        %v1176 = vlaneseq
        %v1177 = vshrl.u32 %v1176, 7
        %v1178 = vsub.s32 %v1175, %v1177
        %v1179 = vrot.slane %v1165, %v1178
        %v1180 = vcombine.high %v1172, %v1172
        %v1181 = vcombine.high %v1179, %v1179
        %v1183 = vunpack.c.l.s4 1966171168
        %v1184 = vunpack.c.0.s8 %v1183
        %v1185 = vlaneseq
        %v1186 = vshrl.u32 %v1185, 7
        %v1187 = vsub.s32 %v1184, %v1186
        %v1188 = vrot.slane %v1172, %v1187
        %v1190 = vunpack.c.l.s4 1966171168
        %v1191 = vunpack.c.0.s8 %v1190
        %v1192 = vlaneseq
        %v1193 = vshrl.u32 %v1192, 7
        %v1194 = vsub.s32 %v1191, %v1193
        %v1195 = vrot.slane %v1179, %v1194
        %v1197 = vunpack.c.l.s4 1966171168
        %v1198 = vunpack.c.0.s8 %v1197
        %v1199 = vlaneseq
        %v1200 = vshrl.u32 %v1199, 7
        %v1201 = vsub.s32 %v1198, %v1200
        %v1202 = vrot.slane %v1180, %v1201
        %v1204 = vunpack.c.l.s4 1966171168
        %v1205 = vunpack.c.0.s8 %v1204
        %v1206 = vlaneseq
        %v1207 = vshrl.u32 %v1206, 7
        %v1208 = vsub.s32 %v1205, %v1207
        %v1209 = vrot.slane %v1181, %v1208
        %v1210 = vcombine.high %v1188, %v1188
        %v1211 = vcombine.high %v1195, %v1195
        %v1212 = vcombine.high %v1202, %v1202
        %v1213 = vcombine.high %v1209, %v1209
        %v1214 = vlaneseq
        %v1215 = vshrl.u32 %v1214, 7
        %v1216 = vsub.s32 0, %v1215
        %v1217 = vrot.slane %v1188, %v1216
        %v1218 = vlaneseq
        %v1219 = vshrl.u32 %v1218, 7
        %v1220 = vsub.s32 0, %v1219
        %v1221 = vrot.slane %v1202, %v1220
        %v1222 = vlaneseq
        %v1223 = vshrl.u32 %v1222, 7
        %v1224 = vsub.s32 0, %v1223
        %v1225 = vrot.slane %v1210, %v1224
        %v1226 = vlaneseq
        %v1227 = vshrl.u32 %v1226, 7
        %v1228 = vsub.s32 0, %v1227
        %v1229 = vrot.slane %v1212, %v1228
        %v1230 = vlaneseq
        %v1231 = vshrl.u32 %v1230, 7
        %v1232 = vsub.s32 0, %v1231
        %v1233 = vrot.slane %v1195, %v1232
        %v1234 = vlaneseq
        %v1235 = vshrl.u32 %v1234, 7
        %v1236 = vsub.s32 0, %v1235
        %v1237 = vrot.slane %v1209, %v1236
        %v1238 = vlaneseq
        %v1239 = vshrl.u32 %v1238, 7
        %v1240 = vsub.s32 0, %v1239
        %v1241 = vrot.slane %v1211, %v1240
        %v1242 = vlaneseq
        %v1243 = vshrl.u32 %v1242, 7
        %v1244 = vsub.s32 0, %v1243
        %v1245 = vrot.slane %v1213, %v1244
        %v1254 = vld [vmem:[%s9] sm:$0xff]
        %v1255 = vld [vmem:[%s9 + $0x8] sm:$0xff]
        %v1256 = vld [vmem:[%s9 + $0x10] sm:$0xff]
        %v1257 = vld [vmem:[%s9 + $0x18] sm:$0xff]
        %v1259 = vsel %vm649, %v1071, 0
        %v1262 = vsel %vm649, %v1072, 0
        %v1265 = vsel %vm649, %v1073, 0
        %v1268 = vsel %vm649, %v1074, 0
        %v1271 = vsel %vm649, %v1075, 0
        %v1274 = vsel %vm649, %v1076, 0
        %v1277 = vsel %vm649, %v1077, 0
        %v1280 = vsel %vm649, %v1078, 0
        %1282 = vmatprep.subr.mxu0 0.0
        %1283 = vmatpush1.msra.mxu0 %v1254
        %1284 = vmatprep.subr.mxu0 0.0
        %1285 = vmatpush1.msra.mxu0 %v1255
        %1286 = vmatprep.subr.mxu0 0.0
        %1287 = vmatpush1.msra.mxu0 %v1256
        %1288 = vmatprep.subr.mxu0 0.0
        %1289 = vmatpush1.msra.mxu0 %v1257
        %1290 = vmatprep.subr.mxu0 0.0
        %1291 = vmatpush1.msra.mxu0 0.0
        %1292 = vmatprep.subr.mxu0 0.0
        %1293 = vmatpush1.msra.mxu0 0.0
        %1294 = vmatprep.subr.mxu0 0.0
        %1295 = vmatpush1.msra.mxu0 0.0
        %1296 = vmatprep.subr.mxu0 0.0
        %1297 = vmatpush1.msra.mxu0 0.0
        %1298 = vmatprep.subr.mxu0 0.0
        %1299 = vmatpush1.msra.mxu0 0.0
        %1300 = vmatprep.subr.mxu0 0.0
        %1301 = vmatpush1.msra.mxu0 0.0
        %1302 = vmatprep.subr.mxu0 0.0
        %1303 = vmatpush1.msra.mxu0 0.0
        %1304 = vmatprep.subr.mxu0 0.0
        %1305 = vmatpush1.msra.mxu0 0.0
        %1306 = vmatprep.subr.mxu0 0.0
        %1307 = vmatpush1.msra.mxu0 0.0
        %1308 = vmatprep.subr.mxu0 0.0
        %1309 = vmatpush1.msra.mxu0 0.0
        %1310 = vmatprep.subr.mxu0 0.0
        %1311 = vmatpush1.msra.mxu0 0.0
        %1312 = vmatprep.subr.mxu0 0.0
        %1313 = vmatpush1.msra.mxu0 0.0
        %1314 = vmatprep.subr.mxu0 0.0
        %1315 = vmatpush1.msra.mxu0 0.0
        %1316 = vmatprep.subr.mxu0 0.0
        %1317 = vmatpush1.msra.mxu0 0.0
        %1318 = vmatprep.subr.mxu0 0.0
        %1319 = vmatpush1.msra.mxu0 0.0
        %1320 = vmatprep.subr.mxu0 0.0
        %1321 = vmatpush1.msra.mxu0 0.0
        %1322 = vmatprep.subr.mxu0 0.0
        %1323 = vmatpush1.msra.mxu0 0.0
        %1324 = vmatprep.subr.mxu0 0.0
        %1325 = vmatpush1.msra.mxu0 0.0
        %1326 = vmatprep.subr.mxu0 0.0
        %1327 = vmatpush1.msra.mxu0 0.0
        %1328 = vmatprep.subr.mxu0 0.0
        %1329 = vmatpush1.msra.mxu0 0.0
        %1330 = vmatprep.subr.mxu0 0.0
        %1331 = vmatpush1.msra.mxu0 0.0
        %1332 = vmatprep.subr.mxu0 0.0
        %1333 = vmatpush1.msra.mxu0 0.0
        %1334 = vmatprep.subr.mxu0 0.0
        %1335 = vmatpush1.msra.mxu0 0.0
        %1336 = vmatprep.subr.mxu0 0.0
        %1337 = vmatpush1.msra.mxu0 0.0
        %1338 = vmatprep.subr.mxu0 0.0
        %1339 = vmatpush1.msra.mxu0 0.0
        %1340 = vmatprep.subr.mxu0 0.0
        %1341 = vmatpush1.msra.mxu0 0.0
        %1342 = vmatprep.subr.mxu0 0.0
        %1343 = vmatpush1.msra.mxu0 0.0
        %1344 = vmatprep.subr.mxu0 0.0
        %1345 = vmatpush1.msra.mxu0 0.0
        %1346 = vmatprep.mubr.f32.mxu0 0.0
        %1347 = vmatmul.mubr.f32.gmra.mrb[0].mxu0 %v1259
        %v1348 = vpop.f32.mrb[0].mxu0
        %v1349 = vadd.f32 %v1217, %v1348
        %v1350 = vpop.f32.mrb[0].mxu0
        %1351 = vmatprep.mubr.f32.mxu0 0.0
        %1352 = vmatmul.mubr.f32.gmra.mrb[0].mxu0 %v1262
        %v1353 = vpop.f32.mrb[0].mxu0
        %v1354 = vadd.f32 %v1221, %v1353
        %v1355 = vpop.f32.mrb[0].mxu0
        %1356 = vmatprep.mubr.f32.mxu0 0.0
        %1357 = vmatmul.mubr.f32.gmra.mrb[0].mxu0 %v1265
        %v1358 = vpop.f32.mrb[0].mxu0
        %v1359 = vadd.f32 %v1225, %v1358
        %v1360 = vpop.f32.mrb[0].mxu0
        %1361 = vmatprep.mubr.f32.mxu0 0.0
        %1362 = vmatmul.mubr.f32.gmra.mrb[0].mxu0 %v1268
        %v1363 = vpop.f32.mrb[0].mxu0
        %v1364 = vadd.f32 %v1229, %v1363
        %v1365 = vpop.f32.mrb[0].mxu0
        %1366 = vmatprep.mubr.f32.mxu0 0.0
        %1367 = vmatmul.mubr.f32.gmra.mrb[0].mxu0 %v1271
        %v1368 = vpop.f32.mrb[0].mxu0
        %v1369 = vadd.f32 %v1233, %v1368
        %v1370 = vpop.f32.mrb[0].mxu0
        %1371 = vmatprep.mubr.f32.mxu0 0.0
        %1372 = vmatmul.mubr.f32.gmra.mrb[0].mxu0 %v1274
        %v1373 = vpop.f32.mrb[0].mxu0
        %v1374 = vadd.f32 %v1237, %v1373
        %v1375 = vpop.f32.mrb[0].mxu0
        %1376 = vmatprep.mubr.f32.mxu0 0.0
        %1377 = vmatmul.mubr.f32.gmra.mrb[0].mxu0 %v1277
        %v1378 = vpop.f32.mrb[0].mxu0
        %v1379 = vadd.f32 %v1241, %v1378
        %v1380 = vpop.f32.mrb[0].mxu0
        %1381 = vmatprep.mubr.f32.mxu0 0.0
        %1382 = vmatmul.mubr.f32.gmra.mrb[0].mxu0 %v1280
        %v1383 = vpop.f32.mrb[0].mxu0
        %v1384 = vadd.f32 %v1245, %v1383
        %v1385 = vpop.f32.mrb[0].mxu0
        %1386 = vdwg.mxu0
        %v1387 = vmax.f32 %v1349, 0.0
        %v1388 = vmax.f32 %v1354, 0.0
        %v1389 = vmax.f32 %v1359, 0.0
        %v1390 = vmax.f32 %v1364, 0.0
        %v1391 = vmax.f32 %v1369, 0.0
        %v1392 = vmax.f32 %v1374, 0.0
        %v1393 = vmax.f32 %v1379, 0.0
        %v1394 = vmax.f32 %v1384, 0.0
        %v1395 = vld [vmem:[%s12] sm:$0xff]
        %v1396 = vld [vmem:[%s12 + $0x8] sm:$0xff]
        %v1397 = vld [vmem:[%s12 + $0x10] sm:$0xff]
        %v1398 = vld [vmem:[%s12 + $0x18] sm:$0xff]
        %v1399 = vld [vmem:[%s13] sm:$0x1]
        %v1401 = vlaneseq
        %v1402 = vshrl.u32 %v1401, 7
        %v1403 = vsub.s32 0, %v1402
        %v1404 = vrot.slane %v1399, %v1403
        %v1407 = vsel %vm649, %v1387, 0
        %v1410 = vsel %vm649, %v1388, 0
        %v1413 = vsel %vm649, %v1389, 0
        %v1416 = vsel %vm649, %v1390, 0
        %v1419 = vsel %vm649, %v1391, 0
        %v1422 = vsel %vm649, %v1392, 0
        %v1425 = vsel %vm649, %v1393, 0
        %v1428 = vsel %vm649, %v1394, 0
        %1430 = vmatprep.subr.mxu0 0.0
        %1431 = vmatpush1.msra.mxu0 %v1395
        %1432 = vmatprep.subr.mxu0 0.0
        %1433 = vmatpush1.msra.mxu0 %v1396
        %1434 = vmatprep.subr.mxu0 0.0
        %1435 = vmatpush1.msra.mxu0 %v1397
        %1436 = vmatprep.subr.mxu0 0.0
        %1437 = vmatpush1.msra.mxu0 %v1398
        %1438 = vmatprep.subr.mxu0 0.0
        %1439 = vmatpush1.msra.mxu0 0.0
        %1440 = vmatprep.subr.mxu0 0.0
        %1441 = vmatpush1.msra.mxu0 0.0
        %1442 = vmatprep.subr.mxu0 0.0
        %1443 = vmatpush1.msra.mxu0 0.0
        %1444 = vmatprep.subr.mxu0 0.0
        %1445 = vmatpush1.msra.mxu0 0.0
        %1446 = vmatprep.subr.mxu0 0.0
        %1447 = vmatpush1.msra.mxu0 0.0
        %1448 = vmatprep.subr.mxu0 0.0
        %1449 = vmatpush1.msra.mxu0 0.0
        %1450 = vmatprep.subr.mxu0 0.0
        %1451 = vmatpush1.msra.mxu0 0.0
        %1452 = vmatprep.subr.mxu0 0.0
        %1453 = vmatpush1.msra.mxu0 0.0
        %1454 = vmatprep.subr.mxu0 0.0
        %1455 = vmatpush1.msra.mxu0 0.0
        %1456 = vmatprep.subr.mxu0 0.0
        %1457 = vmatpush1.msra.mxu0 0.0
        %1458 = vmatprep.subr.mxu0 0.0
        %1459 = vmatpush1.msra.mxu0 0.0
        %1460 = vmatprep.subr.mxu0 0.0
        %1461 = vmatpush1.msra.mxu0 0.0
        %1462 = vmatprep.subr.mxu0 0.0
        %1463 = vmatpush1.msra.mxu0 0.0
        %1464 = vmatprep.subr.mxu0 0.0
        %1465 = vmatpush1.msra.mxu0 0.0
        %1466 = vmatprep.subr.mxu0 0.0
        %1467 = vmatpush1.msra.mxu0 0.0
        %1468 = vmatprep.subr.mxu0 0.0
        %1469 = vmatpush1.msra.mxu0 0.0
        %1470 = vmatprep.subr.mxu0 0.0
        %1471 = vmatpush1.msra.mxu0 0.0
        %1472 = vmatprep.subr.mxu0 0.0
        %1473 = vmatpush1.msra.mxu0 0.0
        %1474 = vmatprep.subr.mxu0 0.0
        %1475 = vmatpush1.msra.mxu0 0.0
        %1476 = vmatprep.subr.mxu0 0.0
        %1477 = vmatpush1.msra.mxu0 0.0
        %1478 = vmatprep.subr.mxu0 0.0
        %1479 = vmatpush1.msra.mxu0 0.0
        %1480 = vmatprep.subr.mxu0 0.0
        %1481 = vmatpush1.msra.mxu0 0.0
        %1482 = vmatprep.subr.mxu0 0.0
        %1483 = vmatpush1.msra.mxu0 0.0
        %1484 = vmatprep.subr.mxu0 0.0
        %1485 = vmatpush1.msra.mxu0 0.0
        %1486 = vmatprep.subr.mxu0 0.0
        %1487 = vmatpush1.msra.mxu0 0.0
        %1488 = vmatprep.subr.mxu0 0.0
        %1489 = vmatpush1.msra.mxu0 0.0
        %1490 = vmatprep.subr.mxu0 0.0
        %1491 = vmatpush1.msra.mxu0 0.0
        %1492 = vmatprep.subr.mxu0 0.0
        %1493 = vmatpush1.msra.mxu0 0.0
        %1494 = vmatprep.mubr.f32.mxu0 0.0
        %1495 = vmatmul.mubr.f32.gmra.mrb[0].mxu0 %v1407
        %v1496 = vpop.f32.mrb[0].mxu0
        %v1497 = vadd.f32 %v1404, %v1496
        %v1498 = vpop.f32.mrb[0].mxu0
        %1499 = vmatprep.mubr.f32.mxu0 0.0
        %1500 = vmatmul.mubr.f32.gmra.mrb[0].mxu0 %v1410
        %v1501 = vpop.f32.mrb[0].mxu0
        %v1502 = vadd.f32 %v1404, %v1501
        %v1503 = vpop.f32.mrb[0].mxu0
        %1504 = vmatprep.mubr.f32.mxu0 0.0
        %1505 = vmatmul.mubr.f32.gmra.mrb[0].mxu0 %v1413
        %v1506 = vpop.f32.mrb[0].mxu0
        %v1507 = vadd.f32 %v1404, %v1506
        %v1508 = vpop.f32.mrb[0].mxu0
        %1509 = vmatprep.mubr.f32.mxu0 0.0
        %1510 = vmatmul.mubr.f32.gmra.mrb[0].mxu0 %v1416
        %v1511 = vpop.f32.mrb[0].mxu0
        %v1512 = vadd.f32 %v1404, %v1511
        %v1513 = vpop.f32.mrb[0].mxu0
        %1514 = vmatprep.mubr.f32.mxu0 0.0
        %1515 = vmatmul.mubr.f32.gmra.mrb[0].mxu0 %v1419
        %v1516 = vpop.f32.mrb[0].mxu0
        %v1517 = vadd.f32 %v1404, %v1516
        %v1518 = vpop.f32.mrb[0].mxu0
        %1519 = vmatprep.mubr.f32.mxu0 0.0
        %1520 = vmatmul.mubr.f32.gmra.mrb[0].mxu0 %v1422
        %v1521 = vpop.f32.mrb[0].mxu0
        %v1522 = vadd.f32 %v1404, %v1521
        %v1523 = vpop.f32.mrb[0].mxu0
        %1524 = vmatprep.mubr.f32.mxu0 0.0
        %1525 = vmatmul.mubr.f32.gmra.mrb[0].mxu0 %v1425
        %v1526 = vpop.f32.mrb[0].mxu0
        %v1527 = vadd.f32 %v1404, %v1526
        %v1528 = vpop.f32.mrb[0].mxu0
        %1529 = vmatprep.mubr.f32.mxu0 0.0
        %1530 = vmatmul.mubr.f32.gmra.mrb[0].mxu0 %v1428
        %v1531 = vpop.f32.mrb[0].mxu0
        %v1532 = vadd.f32 %v1404, %v1531
        %v1533 = vpop.f32.mrb[0].mxu0
        %1534 = vdwg.mxu0
        %v1535 = vmax.f32 %v1497, 0.0
        %v1536 = vmax.f32 %v1502, 0.0
        %v1537 = vmax.f32 %v1507, 0.0
        %v1538 = vmax.f32 %v1512, 0.0
        %v1539 = vmax.f32 %v1517, 0.0
        %v1540 = vmax.f32 %v1522, 0.0
        %v1541 = vmax.f32 %v1527, 0.0
        %v1542 = vmax.f32 %v1532, 0.0
        %v1543 = vld [vmem:[%s14] sm:$0x1]
        %v1545 = vlaneseq
        %v1546 = vshrl.u32 %v1545, 7
        %v1547 = vsub.s32 0, %v1546
        %v1548 = vrot.slane %v1543, %v1547
        %v1550 = vmul.f32 %v1535, %v1548
        %v1551 = vmul.f32 %v1536, %v1548
        %v1552 = vmul.f32 %v1537, %v1548
        %v1553 = vmul.f32 %v1538, %v1548
        %v1554 = vmul.f32 %v1539, %v1548
        %v1555 = vmul.f32 %v1540, %v1548
        %v1556 = vmul.f32 %v1541, %v1548
        %v1557 = vmul.f32 %v1542, %v1548
        %v1558 = vsel %vm649, %v1550, 0.0
        %1559 = vadd.xlane.f32.xlu0 %v1558
        %v1560 = vpop.xlane.xlu0 %1559
        %v1561 = vsel %vm649, %v1551, 0.0
        %1562 = vadd.xlane.f32.xlu0 %v1561
        %v1563 = vpop.xlane.xlu0 %1562
        %v1564 = vsel %vm649, %v1552, 0.0
        %1565 = vadd.xlane.f32.xlu0 %v1564
        %v1566 = vpop.xlane.xlu0 %1565
        %v1567 = vsel %vm649, %v1553, 0.0
        %1568 = vadd.xlane.f32.xlu0 %v1567
        %v1569 = vpop.xlane.xlu0 %1568
        %v1570 = vsel %vm649, %v1554, 0.0
        %1571 = vadd.xlane.f32.xlu0 %v1570
        %v1572 = vpop.xlane.xlu0 %1571
        %v1573 = vsel %vm649, %v1555, 0.0
        %1574 = vadd.xlane.f32.xlu0 %v1573
        %v1575 = vpop.xlane.xlu0 %1574
        %v1576 = vsel %vm649, %v1556, 0.0
        %1577 = vadd.xlane.f32.xlu0 %v1576
        %v1578 = vpop.xlane.xlu0 %1577
        %v1579 = vsel %vm649, %v1557, 0.0
        %1580 = vadd.xlane.f32.xlu0 %v1579
        %v1581 = vpop.xlane.xlu0 %1580
        %v1582 = vld [vmem:[#allocation2] sm:$0x1]
        %v1584 = vlaneseq
        %v1585 = vshrl.u32 %v1584, 7
        %v1586 = vsub.s32 0, %v1585
        %v1587 = vrot.slane %v1582, %v1586
        %1588 = vset.pattern.permute.xlu0 0
        %1589 = vperm.xlu0 %1588, %v1587
        %v1590 = vpop.permute.xlu0 %1589
        %v1592 = vadd.f32 %v1560, %v1590
        %v1593 = vadd.f32 %v1563, %v1590
        %v1594 = vadd.f32 %v1566, %v1590
        %v1595 = vadd.f32 %v1569, %v1590
        %v1596 = vadd.f32 %v1572, %v1590
        %v1597 = vadd.f32 %v1575, %v1590
        %v1598 = vadd.f32 %v1578, %v1590
        %v1599 = vadd.f32 %v1581, %v1590
        %v1608 = vlaneseq
        %v1609 = vand.u32 %v1608, 127
        %v1610 = vlaneseq
        %v1611 = vshrl.u32 %v1610, 7
        %v1612 = vsub.s32 %v1609, %v1611
        %v1613 = vrot.slane %v1592, %v1612
        %v1614 = vlaneseq
        %v1615 = vshrl.u32 %v1614, 7
        %v1616 = vsub.s32 %v1609, %v1615
        %v1617 = vrot.slane %v1593, %v1616
        %v1618 = vlaneseq
        %v1619 = vshrl.u32 %v1618, 7
        %v1620 = vsub.s32 %v1609, %v1619
        %v1621 = vrot.slane %v1594, %v1620
        %v1622 = vlaneseq
        %v1623 = vshrl.u32 %v1622, 7
        %v1624 = vsub.s32 %v1609, %v1623
        %v1625 = vrot.slane %v1595, %v1624
        %v1626 = vlaneseq
        %v1627 = vshrl.u32 %v1626, 7
        %v1628 = vsub.s32 %v1609, %v1627
        %v1629 = vrot.slane %v1596, %v1628
        %v1630 = vlaneseq
        %v1631 = vshrl.u32 %v1630, 7
        %v1632 = vsub.s32 %v1609, %v1631
        %v1633 = vrot.slane %v1597, %v1632
        %v1634 = vlaneseq
        %v1635 = vshrl.u32 %v1634, 7
        %v1636 = vsub.s32 %v1609, %v1635
        %v1637 = vrot.slane %v1598, %v1636
        %v1638 = vlaneseq
        %v1639 = vshrl.u32 %v1638, 7
        %v1640 = vsub.s32 %v1609, %v1639
        %v1641 = vrot.slane %v1599, %v1640
        %vm1642 = vcmask 1041409
        %v1643 = vsel %vm1642, %v1617, %v1613
        %vm1644 = vcmask 1042434
        %v1645 = vsel %vm1644, %v1621, %v1643
        %vm1646 = vcmask 1043459
        %v1647 = vsel %vm1646, %v1625, %v1645
        %vm1648 = vcmask 1044484
        %v1649 = vsel %vm1648, %v1629, %v1647
        %vm1650 = vcmask 1045509
        %v1651 = vsel %vm1650, %v1633, %v1649
        %vm1652 = vcmask 1046534
        %v1653 = vsel %vm1652, %v1637, %v1651
        %vm1654 = vcmask 1047559
        %v1655 = vsel %vm1654, %v1641, %v1653
        %vm1657 = vcmask 64512
        %v1658 = vsel %vm1657, %v1655, -inf
        %1659 = vmax.xlane.f32.xlu0 %v1658
        %v1660 = vpop.xlane.xlu0 %1659
        %v1662 = vlaneseq
        %v1663 = vshrl.u32 %v1662, 7
        %v1664 = vsub.s32 0, %v1663
        %v1665 = vrot.slane %v1660, %v1664
        %v1666 = vlaneseq
        %v1667 = vshrl.u32 %v1666, 7
        %v1668 = vsub.s32 1, %v1667
        %v1669 = vrot.slane %v1660, %v1668
        %v1670 = vlaneseq
        %v1671 = vshrl.u32 %v1670, 7
        %v1672 = vsub.s32 2, %v1671
        %v1673 = vrot.slane %v1660, %v1672
        %v1674 = vlaneseq
        %v1675 = vshrl.u32 %v1674, 7
        %v1676 = vsub.s32 3, %v1675
        %v1677 = vrot.slane %v1660, %v1676
        %v1678 = vlaneseq
        %v1679 = vshrl.u32 %v1678, 7
        %v1680 = vsub.s32 4, %v1679
        %v1681 = vrot.slane %v1660, %v1680
        %v1682 = vlaneseq
        %v1683 = vshrl.u32 %v1682, 7
        %v1684 = vsub.s32 5, %v1683
        %v1685 = vrot.slane %v1660, %v1684
        %v1686 = vlaneseq
        %v1687 = vshrl.u32 %v1686, 7
        %v1688 = vsub.s32 6, %v1687
        %v1689 = vrot.slane %v1660, %v1688
        %v1690 = vlaneseq
        %v1691 = vshrl.u32 %v1690, 7
        %v1692 = vsub.s32 7, %v1691
        %v1693 = vrot.slane %v1660, %v1692
        %v1702 = vsub.f32 %v1592, %v1665
        %v1703 = vsub.f32 %v1593, %v1669
        %v1704 = vsub.f32 %v1594, %v1673
        %v1705 = vsub.f32 %v1595, %v1677
        %v1706 = vsub.f32 %v1596, %v1681
        %v1707 = vsub.f32 %v1597, %v1685
        %v1708 = vsub.f32 %v1598, %v1689
        %v1709 = vsub.f32 %v1599, %v1693
        %v1710 = vmul.f32 %v1702, 1.442695
        %v1711 = vpow.pop %v1710
        %v1712 = vmul.f32 %v1703, 1.442695
        %v1713 = vpow.pop %v1712
        %v1714 = vmul.f32 %v1704, 1.442695
        %v1715 = vpow.pop %v1714
        %v1716 = vmul.f32 %v1705, 1.442695
        %v1717 = vpow.pop %v1716
        %v1718 = vmul.f32 %v1706, 1.442695
        %v1719 = vpow.pop %v1718
        %v1720 = vmul.f32 %v1707, 1.442695
        %v1721 = vpow.pop %v1720
        %v1722 = vmul.f32 %v1708, 1.442695
        %v1723 = vpow.pop %v1722
        %v1724 = vmul.f32 %v1709, 1.442695
        %v1725 = vpow.pop %v1724
        %1734 = vset.pattern.permute.xlu0 0
        %1735 = vperm.xlu0 %1734, %v1711
        %v1736 = vpop.permute.xlu0 %1735
        %1737 = vset.pattern.permute.xlu0 0
        %1738 = vperm.xlu0 %1737, %v1713
        %v1739 = vpop.permute.xlu0 %1738
        %1740 = vset.pattern.permute.xlu0 0
        %1741 = vperm.xlu0 %1740, %v1715
        %v1742 = vpop.permute.xlu0 %1741
        %1743 = vset.pattern.permute.xlu0 0
        %1744 = vperm.xlu0 %1743, %v1717
        %v1745 = vpop.permute.xlu0 %1744
        %1746 = vset.pattern.permute.xlu0 0
        %1747 = vperm.xlu0 %1746, %v1719
        %v1748 = vpop.permute.xlu0 %1747
        %1749 = vset.pattern.permute.xlu0 0
        %1750 = vperm.xlu0 %1749, %v1721
        %v1751 = vpop.permute.xlu0 %1750
        %1752 = vset.pattern.permute.xlu0 0
        %1753 = vperm.xlu0 %1752, %v1723
        %v1754 = vpop.permute.xlu0 %1753
        %1755 = vset.pattern.permute.xlu0 0
        %1756 = vperm.xlu0 %1755, %v1725
        %v1757 = vpop.permute.xlu0 %1756
        %v1758 = vlaneseq
        %v1759 = vshrl.u32 %v1758, 7
        %v1760 = vsub.s32 %v1609, %v1759
        %v1761 = vrot.slane %v1736, %v1760
        %v1762 = vlaneseq
        %v1763 = vshrl.u32 %v1762, 7
        %v1764 = vsub.s32 %v1609, %v1763
        %v1765 = vrot.slane %v1739, %v1764
        %v1766 = vlaneseq
        %v1767 = vshrl.u32 %v1766, 7
        %v1768 = vsub.s32 %v1609, %v1767
        %v1769 = vrot.slane %v1742, %v1768
        %v1770 = vlaneseq
        %v1771 = vshrl.u32 %v1770, 7
        %v1772 = vsub.s32 %v1609, %v1771
        %v1773 = vrot.slane %v1745, %v1772
        %v1774 = vlaneseq
        %v1775 = vshrl.u32 %v1774, 7
        %v1776 = vsub.s32 %v1609, %v1775
        %v1777 = vrot.slane %v1748, %v1776
        %v1778 = vlaneseq
        %v1779 = vshrl.u32 %v1778, 7
        %v1780 = vsub.s32 %v1609, %v1779
        %v1781 = vrot.slane %v1751, %v1780
        %v1782 = vlaneseq
        %v1783 = vshrl.u32 %v1782, 7
        %v1784 = vsub.s32 %v1609, %v1783
        %v1785 = vrot.slane %v1754, %v1784
        %v1786 = vlaneseq
        %v1787 = vshrl.u32 %v1786, 7
        %v1788 = vsub.s32 %v1609, %v1787
        %v1789 = vrot.slane %v1757, %v1788
        %v1790 = vsel %vm1642, %v1765, %v1761
        %v1791 = vsel %vm1644, %v1769, %v1790
        %v1792 = vsel %vm1646, %v1773, %v1791
        %v1793 = vsel %vm1648, %v1777, %v1792
        %v1794 = vsel %vm1650, %v1781, %v1793
        %v1795 = vsel %vm1652, %v1785, %v1794
        %v1796 = vsel %vm1654, %v1789, %v1795
        %v1798 = vsel %vm1657, %v1796, 0.0
        %1799 = vadd.xlane.f32.xlu0 %v1798
        %v1800 = vpop.xlane.xlu0 %1799
        %v1801 = vrcp.pop %v1800
        %v1803 = vlaneseq
        %v1804 = vshrl.u32 %v1803, 7
        %v1805 = vsub.s32 0, %v1804
        %v1806 = vrot.slane %v1801, %v1805
        %v1807 = vlaneseq
        %v1808 = vshrl.u32 %v1807, 7
        %v1809 = vsub.s32 1, %v1808
        %v1810 = vrot.slane %v1801, %v1809
        %v1811 = vlaneseq
        %v1812 = vshrl.u32 %v1811, 7
        %v1813 = vsub.s32 2, %v1812
        %v1814 = vrot.slane %v1801, %v1813
        %v1815 = vlaneseq
        %v1816 = vshrl.u32 %v1815, 7
        %v1817 = vsub.s32 3, %v1816
        %v1818 = vrot.slane %v1801, %v1817
        %v1819 = vlaneseq
        %v1820 = vshrl.u32 %v1819, 7
        %v1821 = vsub.s32 4, %v1820
        %v1822 = vrot.slane %v1801, %v1821
        %v1823 = vlaneseq
        %v1824 = vshrl.u32 %v1823, 7
        %v1825 = vsub.s32 5, %v1824
        %v1826 = vrot.slane %v1801, %v1825
        %v1827 = vlaneseq
        %v1828 = vshrl.u32 %v1827, 7
        %v1829 = vsub.s32 6, %v1828
        %v1830 = vrot.slane %v1801, %v1829
        %v1831 = vlaneseq
        %v1832 = vshrl.u32 %v1831, 7
        %v1833 = vsub.s32 7, %v1832
        %v1834 = vrot.slane %v1801, %v1833
        %v1843 = vmul.f32 %v1711, %v1806
        %v1844 = vmul.f32 %v1713, %v1810
        %v1845 = vmul.f32 %v1715, %v1814
        %v1846 = vmul.f32 %v1717, %v1818
        %v1847 = vmul.f32 %v1719, %v1822
        %v1848 = vmul.f32 %v1721, %v1826
        %v1849 = vmul.f32 %v1723, %v1830
        %v1850 = vmul.f32 %v1725, %v1834
        %1852 = vset.pattern.permute.xlu0 0
        %1853 = vperm.xlu0 %1852, %v1843
        %v1854 = vpop.permute.xlu0 %1853
        %1857 = vset.pattern.permute.xlu0 0
        %1858 = vperm.xlu0 %1857, %v1844
        %v1859 = vpop.permute.xlu0 %1858
        %1862 = vset.pattern.permute.xlu0 0
        %1863 = vperm.xlu0 %1862, %v1845
        %v1864 = vpop.permute.xlu0 %1863
        %1867 = vset.pattern.permute.xlu0 0
        %1868 = vperm.xlu0 %1867, %v1846
        %v1869 = vpop.permute.xlu0 %1868
        %1872 = vset.pattern.permute.xlu0 0
        %1873 = vperm.xlu0 %1872, %v1847
        %v1874 = vpop.permute.xlu0 %1873
        %1877 = vset.pattern.permute.xlu0 0
        %1878 = vperm.xlu0 %1877, %v1848
        %v1879 = vpop.permute.xlu0 %1878
        %1882 = vset.pattern.permute.xlu0 0
        %1883 = vperm.xlu0 %1882, %v1849
        %v1884 = vpop.permute.xlu0 %1883
        %1887 = vset.pattern.permute.xlu0 0
        %1888 = vperm.xlu0 %1887, %v1850
        %v1889 = vpop.permute.xlu0 %1888
        %v1891 = vmul.f32 %v1071, %v1854
        %v1892 = vmul.f32 %v1072, %v1859
        %v1893 = vmul.f32 %v1073, %v1864
        %v1894 = vmul.f32 %v1074, %v1869
        %v1895 = vmul.f32 %v1075, %v1874
        %v1896 = vmul.f32 %v1076, %v1879
        %v1897 = vmul.f32 %v1077, %v1884
        %v1898 = vmul.f32 %v1078, %v1889
        %v1899 = vsel %vm649, %v1891, 0.0
        %v1900 = vrot.slane %v1899, 4
        %v1901 = vadd.f32 %v1899, %v1900
        %v1902 = vrot.slane %v1901, 2
        %v1903 = vadd.f32 %v1901, %v1902
        %v1904 = vrot.slane %v1903, 1
        %v1905 = vadd.f32 %v1903, %v1904
        %v1906 = vsel %vm649, %v1892, 0.0
        %v1907 = vrot.slane %v1906, 4
        %v1908 = vadd.f32 %v1906, %v1907
        %v1909 = vrot.slane %v1908, 2
        %v1910 = vadd.f32 %v1908, %v1909
        %v1911 = vrot.slane %v1910, 1
        %v1912 = vadd.f32 %v1910, %v1911
        %v1913 = vsel %vm649, %v1893, 0.0
        %v1914 = vrot.slane %v1913, 4
        %v1915 = vadd.f32 %v1913, %v1914
        %v1916 = vrot.slane %v1915, 2
        %v1917 = vadd.f32 %v1915, %v1916
        %v1918 = vrot.slane %v1917, 1
        %v1919 = vadd.f32 %v1917, %v1918
        %v1920 = vsel %vm649, %v1894, 0.0
        %v1921 = vrot.slane %v1920, 4
        %v1922 = vadd.f32 %v1920, %v1921
        %v1923 = vrot.slane %v1922, 2
        %v1924 = vadd.f32 %v1922, %v1923
        %v1925 = vrot.slane %v1924, 1
        %v1926 = vadd.f32 %v1924, %v1925
        %v1927 = vsel %vm649, %v1895, 0.0
        %v1928 = vrot.slane %v1927, 4
        %v1929 = vadd.f32 %v1927, %v1928
        %v1930 = vrot.slane %v1929, 2
        %v1931 = vadd.f32 %v1929, %v1930
        %v1932 = vrot.slane %v1931, 1
        %v1933 = vadd.f32 %v1931, %v1932
        %v1934 = vsel %vm649, %v1896, 0.0
        %v1935 = vrot.slane %v1934, 4
        %v1936 = vadd.f32 %v1934, %v1935
        %v1937 = vrot.slane %v1936, 2
        %v1938 = vadd.f32 %v1936, %v1937
        %v1939 = vrot.slane %v1938, 1
        %v1940 = vadd.f32 %v1938, %v1939
        %v1941 = vsel %vm649, %v1897, 0.0
        %v1942 = vrot.slane %v1941, 4
        %v1943 = vadd.f32 %v1941, %v1942
        %v1944 = vrot.slane %v1943, 2
        %v1945 = vadd.f32 %v1943, %v1944
        %v1946 = vrot.slane %v1945, 1
        %v1947 = vadd.f32 %v1945, %v1946
        %v1948 = vsel %vm649, %v1898, 0.0
        %v1949 = vrot.slane %v1948, 4
        %v1950 = vadd.f32 %v1948, %v1949
        %v1951 = vrot.slane %v1950, 2
        %v1952 = vadd.f32 %v1950, %v1951
        %v1953 = vrot.slane %v1952, 1
        %v1954 = vadd.f32 %v1952, %v1953
        %v1963 = vsel %vm1642, %v1912, %v1905
        %v1964 = vsel %vm1644, %v1919, %v1963
        %v1965 = vsel %vm1646, %v1926, %v1964
        %v1966 = vsel %vm1648, %v1933, %v1965
        %v1967 = vsel %vm1650, %v1940, %v1966
        %v1968 = vsel %vm1652, %v1947, %v1967
        %v1969 = vsel %vm1654, %v1954, %v1968
        %1971 = vst.msk [vmem:[%s562] sm:$0xff] %vm649, %v1969
        %s1972 = sand.u32 %s396, 1
        %s1973 = scalar_lea.sflag [#allocation4], %s1972
        %s1974 = sand.u32 %s396, 1
        %s1975 = smul.addr %s1974, 8
        %s1976 = scalar_lea.vmem [#allocation3], %s1975
        // Predicated region
        $region85: #{tpu_custom_call.1} parent=83 // pred_check
          %p1977 = pneg %p406
        $region86: #{tpu_custom_call.1} parent=83 // pred_check_branch
          %1979 = sbr.rel (%p1977) target = $region88
        $region87: #{tpu_custom_call.1} parent=83 // pred_region
          %s1981 = ssub.s32 128, 128
          %1982 = vsyncadd %s1973, %s1981
          %s1983 = smul.addr %s32, 128
          %s1984 = scalar_lea.hbm %s16, %s1983
          %s1986 = sshll.u32 %s1976, 4
          %s1987 = int_to_ptr.vmem [resolvable:$true] %s1986
          %1989 = dma.vmem_to_hbm [thread:$0]  %s1987, 128, %s1984, %s1973
        $region88: #{tpu_custom_call.1} parent=83 // pred_fallthru
          _
      $region84: #{tpu_custom_call.1} parent=5 // pred_fallthru
        _
      %p1990 = scmp.le.s32.totalorder 2, %s27
      // Predicated region
      $region89: #{tpu_custom_call.1} parent=5 // pred_check
        %p1991 = pneg %p1990
      $region90: #{tpu_custom_call.1} parent=5 // pred_check_branch
        %1993 = sbr.rel (%p1991) target = $region92
      $region91: #{tpu_custom_call.1} parent=5 // pred_region
        %s1994 = ssub.s32 %s27, 2
        // Predicated region
        $region93: #{tpu_custom_call.1} parent=91 // pred_check
          %p1995 = pneg %p412
        $region94: #{tpu_custom_call.1} parent=91 // pred_check_branch
          %1997 = sbr.rel (%p1995) target = $region96
        $region95: #{tpu_custom_call.1} parent=91 // pred_region
          %s1998 = sand.u32 %s397, 1
          %s1999 = scalar_lea.sflag [#allocation4], %s1998
          %s2000 = sand.u32 %s397, 1
          %s2001 = smul.addr %s2000, 8
          %s2002 = scalar_lea.vmem [#allocation3], %s2001
          %2003 = dma.done %s1999, 128
        $region96: #{tpu_custom_call.1} parent=91 // pred_fallthru
          _
      $region92: #{tpu_custom_call.1} parent=5 // pred_fallthru
        _
    $region6: #{tpu_custom_call.1} parent=1 // loop_footer
      %s31 = sadd.s32 1, %s27
    $region7: #{tpu_custom_call.1} parent=1 // loop_footer_branch
      %26 = sbr.rel target = $region3
    $region8: #{tpu_custom_call.1} parent=1 // loop_exit
      _
    %2004 = vsyncpa [#allocation4], 1
    %s2005 = scalar_lea.sflag [#allocation4], 1
    %2006 = vsyncpa %s2005, 1

</llo_original>
